<compile_context>
chip_gen: v5e
topology: v5e:2x2
jax: 0.10.0
libtpu: 0.0.40
codegen_flags: <defaults>
</compile_context>

<pallas_src>
import jax
import jax.numpy as jnp
from jax import lax
from jax.experimental import pallas as pl
from jax.experimental.pallas import tpu as pltpu  # noqa: F401  (kept for CORE_PALLEL variant)

# ----------------------------- configuration --------------------------------
BATCH = 2
IMG_C = 3
IMG_HW = 16
PATCH = 8
HIDDEN = 32          # stands in for hidden_size=768
NUM_HEADS = 2
HEAD_DIM = HIDDEN // NUM_HEADS       # 16
FFN = 64
MAX_TEXT_LEN = 8     # stands in for text_config.max_position_embeddings
VOCAB = 16
HEAD_MID = 256       # nn.Linear(hidden, 256)
HEAD_OUT = 3         # nn.Linear(256, 3)
HEAD_PAD = 128       # lane-dense padded head output width (slice [:, :3] outside)
LANE = 128

N_PATCHES = (IMG_HW // PATCH) ** 2        # 4
VIS_LEN = N_PATCHES + 1                   # CLS + patches = 5
PATCH_DIM = IMG_C * PATCH * PATCH         # 192
PATCH_DIM_PAD = 256                       # K padded to a 128 multiple
ATTN_SCALE = 1.0 / float(HEAD_DIM) ** 0.5
LN_EPS_VIS = 1e-5
LN_EPS_TXT = 1e-12

HEADS_W = NUM_HEADS * LANE                # 256: heads laid out on 128-lane boundaries
QKV_W = 3 * HEADS_W                       # 768
KV_W = 2 * HEADS_W                        # 512
FFN_PAD = 128                             # FFN intermediate padded 64 -> 128 lanes

# ---- W_IN slab: (HIDDEN, WIN_COLS) right-hand weights, column offsets -------
WIN_V_QKV = 0                             # vision fused Q|K|V, head-aligned (768)
WIN_V_FF1 = WIN_V_QKV + QKV_W             # 768   vision FFN1 (padded to 128)
WIN_C_KV = WIN_V_FF1 + FFN_PAD            # 896   cross-attn K|V, head-aligned (512)
WIN_T_FF1 = WIN_C_KV + KV_W               # 1408  text FFN1 (padded to 128)
WIN_H_W1 = WIN_T_FF1 + FFN_PAD            # 1536  head Linear(32,256)
WIN_COLS = WIN_H_W1 + HEAD_MID            # 1792

# ---- W_OUT slab: (WOUT_ROWS, 128) output-side weights, row offsets ----------
WOUT_PATCH = 0                            # patch embed (256 x 32)
WOUT_V_WO = WOUT_PATCH + PATCH_DIM_PAD    # 256   vision Wo, head-aligned rows (256 x 32)
WOUT_V_FF2 = WOUT_V_WO + HEADS_W          # 512   vision FFN2 (128 x 32)
WOUT_C_WO = WOUT_V_FF2 + FFN_PAD          # 640   cross Wo (256 x 32)
WOUT_T_FF2 = WOUT_C_WO + HEADS_W          # 896   text FFN2 (128 x 32)
WOUT_H_W2 = WOUT_T_FF2 + FFN_PAD          # 1024  head Linear(256,3) padded to 128 cols
WOUT_ROWS = WOUT_H_W2 + HEAD_MID          # 1280

# ---- VEC slab: (VEC_ROWS_PAD, 768) biases / LN params / prefixes, row offsets
VEC_W = QKV_W                             # 768 (max row width)
VEC_V_BQKV = 0                            # 1 row, width 768 (scale folded into Q part)
VEC_V_BO = 1                              # 1 row, 32
VEC_V_LN1 = 2                             # 2 rows (gamma, beta)
VEC_V_BF1 = 4                             # 1 row, 128
VEC_V_BF2 = 5                             # 1 row, 32
VEC_V_LN2 = 6                             # 2 rows
VEC_V_LNP = 8                             # 2 rows (post vision LN)
VEC_C_BKV = 10                            # 1 row, 512
VEC_C_BO = 11                             # 1 row, 32
VEC_T_LNC = 12                            # 2 rows
VEC_T_BF1 = 14                            # 1 row, 128
VEC_T_BF2 = 15                            # 1 row, 32
VEC_T_LN2 = 16                            # 2 rows
VEC_H_B1 = 18                             # 1 row, 256
VEC_H_B2 = 19                             # 1 row, 128
VEC_VIS_PREFIX = 20                       # B*VIS_LEN rows, 32 (CLS + pos + patch bias)
VEC_X_TXT = VEC_VIS_PREFIX + BATCH * VIS_LEN       # 30, B*TXT_LEN rows, 32 (hoisted)
VEC_Q_CROSS = VEC_X_TXT + BATCH * MAX_TEXT_LEN     # 46, TXT_LEN rows, 256 (hoisted)
VEC_ROWS = VEC_Q_CROSS + MAX_TEXT_LEN              # 54
VEC_ROWS_PAD = 56


# ----------------------------- in-kernel helpers -----------------------------
def _ln(x, vec_ref, row, eps):
    """LayerNorm; gamma is vec row `row`, beta is row `row+1`."""
    g = vec_ref[row:row + 1, 0:HIDDEN]
    b = vec_ref[row + 1:row + 2, 0:HIDDEN]
    mu = jnp.mean(x, axis=-1, keepdims=True)
    var = jnp.mean(jnp.square(x - mu), axis=-1, keepdims=True)
    return (x - mu) * lax.rsqrt(var + eps) * g + b


def _softmax(s):
    s = s - jnp.max(s, axis=-1, keepdims=True)
    p = jnp.exp(s)
    return p * pl.reciprocal(jnp.sum(p, axis=-1, keepdims=True), approx=True)  # EUP


def _mha(q_all, kv_all, wo, bo, *, sq, sk, q_shared):
    """Head-128-aligned multi-head attention, batch stacked along sublanes.

    q_all : (B*sq, HEADS_W) or (sq, HEADS_W) if q_shared (batch-invariant query)
    kv_all: (B*sk, 2*HEADS_W) laid out [K heads | V heads]; scale pre-folded into Q.
    wo    : (HEADS_W, HIDDEN) head-aligned rows; bo: (1, HIDDEN).
    Heads are assembled side-by-side and Wo is a single matmul.
    """
    o_rows = []
    for b in range(BATCH):
        qb = q_all if q_shared else q_all[b * sq:(b + 1) * sq, :]
        kvb = kv_all[b * sk:(b + 1) * sk, :]
        o_heads = []
        for h in range(NUM_HEADS):
            qh = qb[:, h * LANE:(h + 1) * LANE]
            kh = kvb[:, h * LANE:(h + 1) * LANE]
            vh = kvb[:, HEADS_W + h * LANE:HEADS_W + (h + 1) * LANE]
            s = lax.dot_general(qh, kh, (((1,), (1,)), ((), ())),
                                preferred_element_type=jnp.float32)
            o_heads.append(jnp.dot(_softmax(s), vh,
                                   preferred_element_type=jnp.float32))
        o_rows.append(jnp.concatenate(o_heads, axis=1))       # (sq, HEADS_W)
    o = jnp.concatenate(o_rows, axis=0)                       # (B*sq, HEADS_W)
    return jnp.dot(o, wo, preferred_element_type=jnp.float32) + bo


# ----------------------------- fused forward kernel --------------------------
def _fused_forward_kernel(patches_ref, w_in_ref, w_out_ref, vec_ref, out_ref):
    f32 = jnp.float32

    # ---------------- vision encoder (batch stacked on sublanes) -------------
    x = jnp.dot(patches_ref[...],
                w_out_ref[WOUT_PATCH:WOUT_PATCH + PATCH_DIM_PAD, 0:HIDDEN],
                preferred_element_type=f32)
    x = x + vec_ref[VEC_VIS_PREFIX:VEC_VIS_PREFIX + BATCH * VIS_LEN, 0:HIDDEN]

    qkv = jnp.dot(x, w_in_ref[:, WIN_V_QKV:WIN_V_QKV + QKV_W],
                  preferred_element_type=f32)
    qkv = qkv + vec_ref[VEC_V_BQKV:VEC_V_BQKV + 1, 0:QKV_W]
    attn = _mha(qkv[:, 0:HEADS_W], qkv[:, HEADS_W:QKV_W],
                w_out_ref[WOUT_V_WO:WOUT_V_WO + HEADS_W, 0:HIDDEN],
                vec_ref[VEC_V_BO:VEC_V_BO + 1, 0:HIDDEN],
                sq=VIS_LEN, sk=VIS_LEN, q_shared=False)
    x = _ln(x + attn, vec_ref, VEC_V_LN1, LN_EPS_VIS)

    h = jnp.dot(x, w_in_ref[:, WIN_V_FF1:WIN_V_FF1 + FFN_PAD],
                preferred_element_type=f32)
    h = jax.nn.gelu(h + vec_ref[VEC_V_BF1:VEC_V_BF1 + 1, 0:FFN_PAD], approximate=True)
    h = jnp.dot(h, w_out_ref[WOUT_V_FF2:WOUT_V_FF2 + FFN_PAD, 0:HIDDEN],
                preferred_element_type=f32)
    h = h + vec_ref[VEC_V_BF2:VEC_V_BF2 + 1, 0:HIDDEN]
    x = _ln(x + h, vec_ref, VEC_V_LN2, LN_EPS_VIS)
    vis_feats = _ln(x, vec_ref, VEC_V_LNP, LN_EPS_VIS)          # (B*VIS_LEN, HIDDEN)

    # ------- text decoder: only cross-attention + FFN + head run per batch ---
    # (token embedding, embedding LN, self-attention, LN1 and the cross-attn
    #  query projection are batch-invariant -> hoisted to pack time.)
    kv_c = jnp.dot(vis_feats, w_in_ref[:, WIN_C_KV:WIN_C_KV + KV_W],
                   preferred_element_type=f32)
    kv_c = kv_c + vec_ref[VEC_C_BKV:VEC_C_BKV + 1, 0:KV_W]
    q_c = vec_ref[VEC_Q_CROSS:VEC_Q_CROSS + MAX_TEXT_LEN, 0:HEADS_W]
    x_pre = vec_ref[VEC_X_TXT:VEC_X_TXT + BATCH * MAX_TEXT_LEN, 0:HIDDEN]
    attn_c = _mha(q_c, kv_c,
                  w_out_ref[WOUT_C_WO:WOUT_C_WO + HEADS_W, 0:HIDDEN],
                  vec_ref[VEC_C_BO:VEC_C_BO + 1, 0:HIDDEN],
                  sq=MAX_TEXT_LEN, sk=VIS_LEN, q_shared=True)
    xt = _ln(x_pre + attn_c, vec_ref, VEC_T_LNC, LN_EPS_TXT)

    h = jnp.dot(xt, w_in_ref[:, WIN_T_FF1:WIN_T_FF1 + FFN_PAD],
                preferred_element_type=f32)
    h = jax.nn.gelu(h + vec_ref[VEC_T_BF1:VEC_T_BF1 + 1, 0:FFN_PAD], approximate=True)
    h = jnp.dot(h, w_out_ref[WOUT_T_FF2:WOUT_T_FF2 + FFN_PAD, 0:HIDDEN],
                preferred_element_type=f32)
    h = h + vec_ref[VEC_T_BF2:VEC_T_BF2 + 1, 0:HIDDEN]
    xt = _ln(xt + h, vec_ref, VEC_T_LN2, LN_EPS_TXT)            # (B*TXT_LEN, HIDDEN)

    # ---- trainable MLP head on CLS token: Linear(32,256)->ReLU->Linear(256,3)
    cls = jnp.concatenate([xt[b * MAX_TEXT_LEN:b * MAX_TEXT_LEN + 1, :]
                           for b in range(BATCH)], axis=0)      # (B, HIDDEN)
    h1 = jnp.dot(cls, w_in_ref[:, WIN_H_W1:WIN_H_W1 + HEAD_MID],
                 preferred_element_type=f32)
    h1 = jnp.maximum(h1 + vec_ref[VEC_H_B1:VEC_H_B1 + 1, 0:HEAD_MID], 0.0)
    out = jnp.dot(h1, w_out_ref[WOUT_H_W2:WOUT_H_W2 + HEAD_MID, 0:HEAD_PAD],
                  preferred_element_type=f32)
    out = out + vec_ref[VEC_H_B2:VEC_H_B2 + 1, 0:HEAD_PAD]
    out_ref[...] = out.astype(out_ref.dtype)                    # (B, 128) lane-dense store


# ----------------------------- wrapper ---------------------------------------
def _extract_patches(pixel_values):
    """NCHW -> (B*VIS_LEN, PATCH_DIM_PAD); CLS rows are zero, K padded 192->256."""
    B, C, H, W = pixel_values.shape
    nh, nw = H // PATCH, W // PATCH
    p = pixel_values.reshape(B, C, nh, PATCH, nw, PATCH)
    p = p.transpose(0, 2, 4, 1, 3, 5).reshape(B, nh * nw, C * PATCH * PATCH)
    p = jnp.pad(p, ((0, 0), (1, 0), (0, PATCH_DIM_PAD - PATCH_DIM)))
    return p.reshape(B * VIS_LEN, PATCH_DIM_PAD)


def blip_with_metrics_head_forward(pixel_values, packed):
    """Mirrors BLIPWithMetricsHead.forward; one fused pallas_call, no grid."""
    patches = _extract_patches(pixel_values)
    w_in, w_out, vec = packed
    out = pl.pallas_call(
        _fused_forward_kernel,
        out_shape=jax.ShapeDtypeStruct((BATCH, HEAD_PAD), jnp.float32),
    )(patches, w_in, w_out, vec)
    return out[:, :HEAD_OUT]


# ----------------------------- parameter init --------------------------------
def _dense(key, k_in, k_out):
    return jax.random.normal(key, (k_in, k_out), jnp.float32) * 0.02


def _init_attn(key, d):
    ks = jax.random.split(key, 4)
    return dict(
        wq=_dense(ks[0], d, d), bq=jnp.zeros(d, jnp.float32),
        wk=_dense(ks[1], d, d), bk=jnp.zeros(d, jnp.float32),
        wv=_dense(ks[2], d, d), bv=jnp.zeros(d, jnp.float32),
        wo=_dense(ks[3], d, d), bo=jnp.zeros(d, jnp.float32),
    )


def _init_block(key, d, ffn, cross=False):
    ks = jax.random.split(key, 4)
    p = dict(
        self=_init_attn(ks[0], d),
        ln1_g=jnp.ones(d, jnp.float32), ln1_b=jnp.zeros(d, jnp.float32),
        w_ffn1=_dense(ks[1], d, ffn), b_ffn1=jnp.zeros(ffn, jnp.float32),
        w_ffn2=_dense(ks[2], ffn, d), b_ffn2=jnp.zeros(d, jnp.float32),
        ln2_g=jnp.ones(d, jnp.float32), ln2_b=jnp.zeros(d, jnp.float32),
    )
    if cross:
        p["cross"] = _init_attn(ks[3], d)
        p["ln_c_g"] = jnp.ones(d, jnp.float32)
        p["ln_c_b"] = jnp.zeros(d, jnp.float32)
    return p


def init_params(key):
    ks = jax.random.split(key, 10)
    return dict(
        patch_w=_dense(ks[0], PATCH_DIM, HIDDEN),
        patch_b=jnp.zeros(HIDDEN, jnp.float32),
        cls=jax.random.normal(ks[1], (1, HIDDEN), jnp.float32) * 0.02,
        vis_pos=jax.random.normal(ks[2], (VIS_LEN, HIDDEN), jnp.float32) * 0.02,
        vis_block=_init_block(ks[3], HIDDEN, FFN, cross=False),
        vis_ln_g=jnp.ones(HIDDEN, jnp.float32), vis_ln_b=jnp.zeros(HIDDEN, jnp.float32),
        word_emb=jax.random.normal(ks[4], (VOCAB, HIDDEN), jnp.float32) * 0.02,
        txt_pos=jax.random.normal(ks[5], (MAX_TEXT_LEN, HIDDEN), jnp.float32) * 0.02,
        txt_ln_g=jnp.ones(HIDDEN, jnp.float32), txt_ln_b=jnp.zeros(HIDDEN, jnp.float32),
        txt_block=_init_block(ks[6], HIDDEN, FFN, cross=True),
        head_w1=_dense(ks[7], HIDDEN, HEAD_MID), head_b1=jnp.zeros(HEAD_MID, jnp.float32),
        head_w2=_dense(ks[8], HEAD_MID, HEAD_OUT), head_b2=jnp.zeros(HEAD_OUT, jnp.float32),
    )


# --------------------- one-time parameter packing (plain JAX) ----------------
def _head_align_cols(w):
    """(R, NUM_HEADS*HEAD_DIM) -> (R, NUM_HEADS*128), each head on a 128-lane boundary."""
    out = jnp.zeros((w.shape[0], HEADS_W), jnp.float32)
    for h in range(NUM_HEADS):
        out = out.at[:, h * LANE:h * LANE + HEAD_DIM].set(
            w[:, h * HEAD_DIM:(h + 1) * HEAD_DIM])
    return out


def _head_align_rows(w):
    """(NUM_HEADS*HEAD_DIM, C) -> (NUM_HEADS*128, C), head-aligned rows for Wo."""
    out = jnp.zeros((HEADS_W, w.shape[1]), jnp.float32)
    for h in range(NUM_HEADS):
        out = out.at[h * LANE:h * LANE + HEAD_DIM, :].set(
            w[h * HEAD_DIM:(h + 1) * HEAD_DIM, :])
    return out


def _plain_ln(x, g, b, eps):
    mu = x.mean(-1, keepdims=True)
    var = ((x - mu) ** 2).mean(-1, keepdims=True)
    return (x - mu) / jnp.sqrt(var + eps) * g + b


def _plain_self_attn(x, a):
    s_len = x.shape[0]
    q = (x @ a["wq"] + a["bq"]) * ATTN_SCALE
    k = x @ a["wk"] + a["bk"]
    v = x @ a["wv"] + a["bv"]

    def split(t):
        return t.reshape(s_len, NUM_HEADS, HEAD_DIM).transpose(1, 0, 2)

    q, k, v = split(q), split(k), split(v)
    p = jax.nn.softmax(jnp.einsum("hqd,hkd->hqk", q, k), axis=-1)
    o = jnp.einsum("hqk,hkd->hqd", p, v).transpose(1, 0, 2).reshape(s_len, HIDDEN)
    return o @ a["wo"] + a["bo"]


def pack_params(p):
    vb, tb = p["vis_block"], p["txt_block"]
    va, ta, ca = vb["self"], tb["self"], tb["cross"]

    # ---- hoisted batch-invariant text prefix (input_ids are all zeros) ------
    x_txt = p["word_emb"][0:1] + p["txt_pos"]                        # (T, D)
    x_txt = _plain_ln(x_txt, p["txt_ln_g"], p["txt_ln_b"], LN_EPS_TXT)
    x_pre = _plain_ln(x_txt + _plain_self_attn(x_txt, ta),
                      tb["ln1_g"], tb["ln1_b"], LN_EPS_TXT)          # (T, D)
    q_cross = (x_pre @ ca["wq"] + ca["bq"].reshape(1, -1)) * ATTN_SCALE
    q_cross_a = _head_align_cols(q_cross)                            # (T, 256)

    # ---- W_IN slab (HIDDEN x 1792) ------------------------------------------
    v_wqkv = jnp.concatenate([_head_align_cols(va["wq"] * ATTN_SCALE),
                              _head_align_cols(va["wk"]),
                              _head_align_cols(va["wv"])], axis=1)   # (32, 768)
    c_wkv = jnp.concatenate([_head_align_cols(ca["wk"]),
                             _head_align_cols(ca["wv"])], axis=1)    # (32, 512)
    v_wf1 = jnp.zeros((HIDDEN, FFN_PAD), jnp.float32).at[:, :FFN].set(vb["w_ffn1"])
    t_wf1 = jnp.zeros((HIDDEN, FFN_PAD), jnp.float32).at[:, :FFN].set(tb["w_ffn1"])
    w_in = jnp.concatenate([v_wqkv, v_wf1, c_wkv, t_wf1, p["head_w1"]], axis=1)
    assert w_in.shape == (HIDDEN, WIN_COLS)

    # ---- W_OUT slab (1280 x 128) ---------------------------------------------
    def col_pad(w):
        return jnp.pad(w, ((0, 0), (0, LANE - w.shape[1])))

    patch_w = jnp.pad(p["patch_w"], ((0, PATCH_DIM_PAD - PATCH_DIM), (0, 0)))
    v_wf2 = jnp.zeros((FFN_PAD, HIDDEN), jnp.float32).at[:FFN, :].set(vb["w_ffn2"])
    t_wf2 = jnp.zeros((FFN_PAD, HIDDEN), jnp.float32).at[:FFN, :].set(tb["w_ffn2"])
    h_w2 = jnp.zeros((HEAD_MID, HEAD_PAD), jnp.float32).at[:, :HEAD_OUT].set(p["head_w2"])
    w_out = jnp.concatenate(
        [col_pad(patch_w), col_pad(_head_align_rows(va["wo"])), col_pad(v_wf2),
         col_pad(_head_align_rows(ca["wo"])), col_pad(t_wf2), h_w2], axis=0)
    assert w_out.shape == (WOUT_ROWS, LANE)

    # ---- VEC slab (56 x 768) --------------------------------------------------
    def vrow(x):
        x = x if x.ndim == 2 else x.reshape(1, -1)
        return jnp.pad(x, ((0, 0), (0, VEC_W - x.shape[1])))

    # CLS token + positional embedding + patch-embed bias folded into one
    # additive prefix (CLS rows of the patch matrix are zero), tiled per batch.
    vis_prefix = jnp.concatenate(
        [p["cls"] + p["vis_pos"][0:1],
         p["vis_pos"][1:] + p["patch_b"].reshape(1, -1)], axis=0)
    vis_prefix = jnp.tile(vis_prefix, (BATCH, 1))                    # (B*VIS_LEN, 32)
    x_pre_t = jnp.tile(x_pre, (BATCH, 1))                            # (B*T, 32)

    v_bqkv = jnp.concatenate([_head_align_cols((va["bq"] * ATTN_SCALE).reshape(1, -1)),
                              _head_align_cols(va["bk"].reshape(1, -1)),
                              _head_align_cols(va["bv"].reshape(1, -1))], axis=1)
    c_bkv = jnp.concatenate([_head_align_cols(ca["bk"].reshape(1, -1)),
                             _head_align_cols(ca["bv"].reshape(1, -1))], axis=1)
    v_bf1 = jnp.zeros((1, FFN_PAD), jnp.float32).at[0, :FFN].set(vb["b_ffn1"])
    t_bf1 = jnp.zeros((1, FFN_PAD), jnp.float32).at[0, :FFN].set(tb["b_ffn1"])
    h_b2 = jnp.zeros((1, HEAD_PAD), jnp.float32).at[0, :HEAD_OUT].set(p["head_b2"])

    rows = [
        vrow(v_bqkv),                                   # VEC_V_BQKV
        vrow(va["bo"]),                                 # VEC_V_BO
        vrow(vb["ln1_g"]), vrow(vb["ln1_b"]),           # VEC_V_LN1
        vrow(v_bf1),                                    # VEC_V_BF1
        vrow(vb["b_ffn2"]),                             # VEC_V_BF2
        vrow(vb["ln2_g"]), vrow(vb["ln2_b"]),           # VEC_V_LN2
        vrow(p["vis_ln_g"]), vrow(p["vis_ln_b"]),       # VEC_V_LNP
        vrow(c_bkv),                                    # VEC_C_BKV
        vrow(ca["bo"]),                                 # VEC_C_BO
        vrow(tb["ln_c_g"]), vrow(tb["ln_c_b"]),         # VEC_T_LNC
        vrow(t_bf1),                                    # VEC_T_BF1
        vrow(tb["b_ffn2"]),                             # VEC_T_BF2
        vrow(tb["ln2_g"]), vrow(tb["ln2_b"]),           # VEC_T_LN2
        vrow(p["head_b1"]),                             # VEC_H_B1
        vrow(h_b2),                                     # VEC_H_B2
        vrow(vis_prefix),                               # VEC_VIS_PREFIX (B*VIS_LEN rows)
        vrow(x_pre_t),                                  # VEC_X_TXT (B*TXT_LEN rows)
        vrow(q_cross_a),                                # VEC_Q_CROSS (TXT_LEN rows)
    ]
    vec = jnp.concatenate(rows, axis=0)
    assert vec.shape == (VEC_ROWS, VEC_W)
    vec = jnp.pad(vec, ((0, VEC_ROWS_PAD - VEC_ROWS), (0, 0)))
    return w_in, w_out, vec


# ----------------------------- main -------------------------------------------
if __name__ == "__main__":
    root = jax.random.PRNGKey(0)
    pkey, xkey = jax.random.split(root)
    params = init_params(pkey)
    packed = pack_params(params)          # one-time weight layout packing + text-prefix hoist
    pixel_values = jax.random.normal(xkey, (BATCH, IMG_C, IMG_HW, IMG_HW), jnp.float32)

    fwd = jax.jit(blip_with_metrics_head_forward)
    metrics_pred = jax.block_until_ready(fwd(pixel_values, packed))

    assert metrics_pred.shape == (BATCH, HEAD_OUT)
    assert metrics_pred.dtype == jnp.float32
    assert bool(jnp.all(jnp.isfinite(metrics_pred)))
    print("KERNEL_OK")
</pallas_src>

<mosaic_0001>
module attributes {stable_mosaic.version = 11 : i64} {
  func.func @_fused_forward_kernel(%arg0: memref<10x256xf32, #tpu.memory_space<vmem>>, %arg1: memref<32x1792xf32, #tpu.memory_space<vmem>>, %arg2: memref<1280x128xf32, #tpu.memory_space<vmem>>, %arg3: memref<56x768xf32, #tpu.memory_space<vmem>>, %arg4: memref<2x128xf32, #tpu.memory_space<vmem>>) attributes {dimension_semantics = [], scalar_prefetch = 0 : i64, scratch_operands = 0 : i64, tpu.core_type = #tpu.core_type<tc>} {
    %c0 = arith.constant 0 : index
    %c0_0 = arith.constant 0 : index
    %0 = vector.load %arg0[%c0, %c0_0] : memref<10x256xf32, #tpu.memory_space<vmem>>, vector<10x256xf32>
    %c0_1 = arith.constant 0 : index
    %c0_2 = arith.constant 0 : index
    %1 = vector.load %arg2[%c0_1, %c0_2] : memref<1280x128xf32, #tpu.memory_space<vmem>>, vector<256x32xf32>
    %cst = arith.constant dense<0.000000e+00> : vector<10x32xf32>
    %2 = tpu.matmul %0, %1, %cst {dimension_numbers = #tpu.dot_dimension_numbers<[1], [0], [0], [1], [0, 0, 1, 1], [], []>} : vector<10x256xf32>, vector<256x32xf32>, vector<10x32xf32> -> vector<10x32xf32>
    %c20 = arith.constant 20 : index
    %c0_3 = arith.constant 0 : index
    %3 = vector.load %arg3[%c20, %c0_3] : memref<56x768xf32, #tpu.memory_space<vmem>>, vector<10x32xf32>
    %4 = arith.addf %2, %3 : vector<10x32xf32>
    %c0_4 = arith.constant 0 : index
    %c0_5 = arith.constant 0 : index
    %5 = vector.load %arg1[%c0_4, %c0_5] : memref<32x1792xf32, #tpu.memory_space<vmem>>, vector<32x768xf32>
    %cst_6 = arith.constant dense<0.000000e+00> : vector<10x768xf32>
    %6 = tpu.matmul %4, %5, %cst_6 {dimension_numbers = #tpu.dot_dimension_numbers<[1], [0], [0], [1], [0, 0, 1, 1], [], []>} : vector<10x32xf32>, vector<32x768xf32>, vector<10x768xf32> -> vector<10x768xf32>
    %c0_7 = arith.constant 0 : index
    %c0_8 = arith.constant 0 : index
    %7 = vector.load %arg3[%c0_7, %c0_8] : memref<56x768xf32, #tpu.memory_space<vmem>>, vector<1x768xf32>
    %8 = vector.broadcast %7 : vector<1x768xf32> to vector<10x768xf32>
    %9 = arith.addf %6, %8 : vector<10x768xf32>
    %10 = vector.extract_strided_slice %9 {offsets = [0, 0], sizes = [10, 256], strides = [1, 1]} : vector<10x768xf32> to vector<10x256xf32>
    %11 = vector.extract_strided_slice %9 {offsets = [0, 256], sizes = [10, 512], strides = [1, 1]} : vector<10x768xf32> to vector<10x512xf32>
    %c256 = arith.constant 256 : index
    %c0_9 = arith.constant 0 : index
    %12 = vector.load %arg2[%c256, %c0_9] : memref<1280x128xf32, #tpu.memory_space<vmem>>, vector<256x32xf32>
    %c1 = arith.constant 1 : index
    %c0_10 = arith.constant 0 : index
    %13 = vector.load %arg3[%c1, %c0_10] : memref<56x768xf32, #tpu.memory_space<vmem>>, vector<1x32xf32>
    %14 = vector.extract_strided_slice %10 {offsets = [0, 0], sizes = [5, 256], strides = [1, 1]} : vector<10x256xf32> to vector<5x256xf32>
    %15 = vector.extract_strided_slice %11 {offsets = [0, 0], sizes = [5, 512], strides = [1, 1]} : vector<10x512xf32> to vector<5x512xf32>
    %16 = vector.extract_strided_slice %14 {offsets = [0, 0], sizes = [5, 128], strides = [1, 1]} : vector<5x256xf32> to vector<5x128xf32>
    %17 = vector.extract_strided_slice %15 {offsets = [0, 0], sizes = [5, 128], strides = [1, 1]} : vector<5x512xf32> to vector<5x128xf32>
    %18 = vector.extract_strided_slice %15 {offsets = [0, 256], sizes = [5, 128], strides = [1, 1]} : vector<5x512xf32> to vector<5x128xf32>
    %cst_11 = arith.constant dense<0.000000e+00> : vector<5x5xf32>
    %19 = tpu.matmul %16, %17, %cst_11 {dimension_numbers = #tpu.dot_dimension_numbers<[1], [1], [0], [0], [0, 0, 1, 0], [], []>} : vector<5x128xf32>, vector<5x128xf32>, vector<5x5xf32> -> vector<5x5xf32>
    %cst_12 = arith.constant dense<0xFF800000> : vector<5xf32>
    %20 = vector.multi_reduction <maximumf>, %19, %cst_12 [1] : vector<5x5xf32> to vector<5xf32>
    %21 = vector.shape_cast %20 : vector<5xf32> to vector<5x1xf32>
    %22 = vector.broadcast %21 : vector<5x1xf32> to vector<5x5xf32>
    %23 = arith.subf %19, %22 : vector<5x5xf32>
    %24 = math.exp %23 : vector<5x5xf32>
    %cst_13 = arith.constant dense<0.000000e+00> : vector<5xf32>
    %25 = vector.multi_reduction <add>, %24, %cst_13 [1] : vector<5x5xf32> to vector<5xf32>
    %26 = vector.shape_cast %25 : vector<5xf32> to vector<5x1xf32>
    %27 = tpu.reciprocal %26 {approx = true} : vector<5x1xf32> -> vector<5x1xf32>
    %28 = vector.broadcast %27 : vector<5x1xf32> to vector<5x5xf32>
    %29 = arith.mulf %24, %28 : vector<5x5xf32>
    %cst_14 = arith.constant dense<0.000000e+00> : vector<5x128xf32>
    %30 = tpu.matmul %29, %18, %cst_14 {dimension_numbers = #tpu.dot_dimension_numbers<[1], [0], [0], [1], [0, 0, 1, 1], [], []>} : vector<5x5xf32>, vector<5x128xf32>, vector<5x128xf32> -> vector<5x128xf32>
    %31 = vector.extract_strided_slice %14 {offsets = [0, 128], sizes = [5, 128], strides = [1, 1]} : vector<5x256xf32> to vector<5x128xf32>
    %32 = vector.extract_strided_slice %15 {offsets = [0, 128], sizes = [5, 128], strides = [1, 1]} : vector<5x512xf32> to vector<5x128xf32>
    %33 = vector.extract_strided_slice %15 {offsets = [0, 384], sizes = [5, 128], strides = [1, 1]} : vector<5x512xf32> to vector<5x128xf32>
    %cst_15 = arith.constant dense<0.000000e+00> : vector<5x5xf32>
    %34 = tpu.matmul %31, %32, %cst_15 {dimension_numbers = #tpu.dot_dimension_numbers<[1], [1], [0], [0], [0, 0, 1, 0], [], []>} : vector<5x128xf32>, vector<5x128xf32>, vector<5x5xf32> -> vector<5x5xf32>
    %cst_16 = arith.constant dense<0xFF800000> : vector<5xf32>
    %35 = vector.multi_reduction <maximumf>, %34, %cst_16 [1] : vector<5x5xf32> to vector<5xf32>
    %36 = vector.shape_cast %35 : vector<5xf32> to vector<5x1xf32>
    %37 = vector.broadcast %36 : vector<5x1xf32> to vector<5x5xf32>
    %38 = arith.subf %34, %37 : vector<5x5xf32>
    %39 = math.exp %38 : vector<5x5xf32>
    %cst_17 = arith.constant dense<0.000000e+00> : vector<5xf32>
    %40 = vector.multi_reduction <add>, %39, %cst_17 [1] : vector<5x5xf32> to vector<5xf32>
    %41 = vector.shape_cast %40 : vector<5xf32> to vector<5x1xf32>
    %42 = tpu.reciprocal %41 {approx = true} : vector<5x1xf32> -> vector<5x1xf32>
    %43 = vector.broadcast %42 : vector<5x1xf32> to vector<5x5xf32>
    %44 = arith.mulf %39, %43 : vector<5x5xf32>
    %cst_18 = arith.constant dense<0.000000e+00> : vector<5x128xf32>
    %45 = tpu.matmul %44, %33, %cst_18 {dimension_numbers = #tpu.dot_dimension_numbers<[1], [0], [0], [1], [0, 0, 1, 1], [], []>} : vector<5x5xf32>, vector<5x128xf32>, vector<5x128xf32> -> vector<5x128xf32>
    %46 = tpu.concatenate %30, %45 in 1 : vector<5x128xf32>, vector<5x128xf32> -> vector<5x256xf32>
    %47 = vector.extract_strided_slice %10 {offsets = [5, 0], sizes = [5, 256], strides = [1, 1]} : vector<10x256xf32> to vector<5x256xf32>
    %48 = vector.extract_strided_slice %11 {offsets = [5, 0], sizes = [5, 512], strides = [1, 1]} : vector<10x512xf32> to vector<5x512xf32>
    %49 = vector.extract_strided_slice %47 {offsets = [0, 0], sizes = [5, 128], strides = [1, 1]} : vector<5x256xf32> to vector<5x128xf32>
    %50 = vector.extract_strided_slice %48 {offsets = [0, 0], sizes = [5, 128], strides = [1, 1]} : vector<5x512xf32> to vector<5x128xf32>
    %51 = vector.extract_strided_slice %48 {offsets = [0, 256], sizes = [5, 128], strides = [1, 1]} : vector<5x512xf32> to vector<5x128xf32>
    %cst_19 = arith.constant dense<0.000000e+00> : vector<5x5xf32>
    %52 = tpu.matmul %49, %50, %cst_19 {dimension_numbers = #tpu.dot_dimension_numbers<[1], [1], [0], [0], [0, 0, 1, 0], [], []>} : vector<5x128xf32>, vector<5x128xf32>, vector<5x5xf32> -> vector<5x5xf32>
    %cst_20 = arith.constant dense<0xFF800000> : vector<5xf32>
    %53 = vector.multi_reduction <maximumf>, %52, %cst_20 [1] : vector<5x5xf32> to vector<5xf32>
    %54 = vector.shape_cast %53 : vector<5xf32> to vector<5x1xf32>
    %55 = vector.broadcast %54 : vector<5x1xf32> to vector<5x5xf32>
    %56 = arith.subf %52, %55 : vector<5x5xf32>
    %57 = math.exp %56 : vector<5x5xf32>
    %cst_21 = arith.constant dense<0.000000e+00> : vector<5xf32>
    %58 = vector.multi_reduction <add>, %57, %cst_21 [1] : vector<5x5xf32> to vector<5xf32>
    %59 = vector.shape_cast %58 : vector<5xf32> to vector<5x1xf32>
    %60 = tpu.reciprocal %59 {approx = true} : vector<5x1xf32> -> vector<5x1xf32>
    %61 = vector.broadcast %60 : vector<5x1xf32> to vector<5x5xf32>
    %62 = arith.mulf %57, %61 : vector<5x5xf32>
    %cst_22 = arith.constant dense<0.000000e+00> : vector<5x128xf32>
    %63 = tpu.matmul %62, %51, %cst_22 {dimension_numbers = #tpu.dot_dimension_numbers<[1], [0], [0], [1], [0, 0, 1, 1], [], []>} : vector<5x5xf32>, vector<5x128xf32>, vector<5x128xf32> -> vector<5x128xf32>
    %64 = vector.extract_strided_slice %47 {offsets = [0, 128], sizes = [5, 128], strides = [1, 1]} : vector<5x256xf32> to vector<5x128xf32>
    %65 = vector.extract_strided_slice %48 {offsets = [0, 128], sizes = [5, 128], strides = [1, 1]} : vector<5x512xf32> to vector<5x128xf32>
    %66 = vector.extract_strided_slice %48 {offsets = [0, 384], sizes = [5, 128], strides = [1, 1]} : vector<5x512xf32> to vector<5x128xf32>
    %cst_23 = arith.constant dense<0.000000e+00> : vector<5x5xf32>
    %67 = tpu.matmul %64, %65, %cst_23 {dimension_numbers = #tpu.dot_dimension_numbers<[1], [1], [0], [0], [0, 0, 1, 0], [], []>} : vector<5x128xf32>, vector<5x128xf32>, vector<5x5xf32> -> vector<5x5xf32>
    %cst_24 = arith.constant dense<0xFF800000> : vector<5xf32>
    %68 = vector.multi_reduction <maximumf>, %67, %cst_24 [1] : vector<5x5xf32> to vector<5xf32>
    %69 = vector.shape_cast %68 : vector<5xf32> to vector<5x1xf32>
    %70 = vector.broadcast %69 : vector<5x1xf32> to vector<5x5xf32>
    %71 = arith.subf %67, %70 : vector<5x5xf32>
    %72 = math.exp %71 : vector<5x5xf32>
    %cst_25 = arith.constant dense<0.000000e+00> : vector<5xf32>
    %73 = vector.multi_reduction <add>, %72, %cst_25 [1] : vector<5x5xf32> to vector<5xf32>
    %74 = vector.shape_cast %73 : vector<5xf32> to vector<5x1xf32>
    %75 = tpu.reciprocal %74 {approx = true} : vector<5x1xf32> -> vector<5x1xf32>
    %76 = vector.broadcast %75 : vector<5x1xf32> to vector<5x5xf32>
    %77 = arith.mulf %72, %76 : vector<5x5xf32>
    %cst_26 = arith.constant dense<0.000000e+00> : vector<5x128xf32>
    %78 = tpu.matmul %77, %66, %cst_26 {dimension_numbers = #tpu.dot_dimension_numbers<[1], [0], [0], [1], [0, 0, 1, 1], [], []>} : vector<5x5xf32>, vector<5x128xf32>, vector<5x128xf32> -> vector<5x128xf32>
    %79 = tpu.concatenate %63, %78 in 1 : vector<5x128xf32>, vector<5x128xf32> -> vector<5x256xf32>
    %80 = tpu.concatenate %46, %79 in 0 : vector<5x256xf32>, vector<5x256xf32> -> vector<10x256xf32>
    %cst_27 = arith.constant dense<0.000000e+00> : vector<10x32xf32>
    %81 = tpu.matmul %80, %12, %cst_27 {dimension_numbers = #tpu.dot_dimension_numbers<[1], [0], [0], [1], [0, 0, 1, 1], [], []>} : vector<10x256xf32>, vector<256x32xf32>, vector<10x32xf32> -> vector<10x32xf32>
    %82 = vector.broadcast %13 : vector<1x32xf32> to vector<10x32xf32>
    %83 = arith.addf %81, %82 : vector<10x32xf32>
    %84 = arith.addf %4, %83 : vector<10x32xf32>
    %c2 = arith.constant 2 : index
    %c0_28 = arith.constant 0 : index
    %85 = vector.load %arg3[%c2, %c0_28] : memref<56x768xf32, #tpu.memory_space<vmem>>, vector<1x32xf32>
    %c3 = arith.constant 3 : index
    %c0_29 = arith.constant 0 : index
    %86 = vector.load %arg3[%c3, %c0_29] : memref<56x768xf32, #tpu.memory_space<vmem>>, vector<1x32xf32>
    %cst_30 = arith.constant dense<0.000000e+00> : vector<10xf32>
    %87 = vector.multi_reduction <add>, %84, %cst_30 [1] : vector<10x32xf32> to vector<10xf32>
    %88 = vector.shape_cast %87 : vector<10xf32> to vector<10x1xf32>
    %cst_31 = arith.constant 3.200000e+01 : f32
    %89 = vector.broadcast %cst_31 : f32 to vector<10x1xf32>
    %90 = arith.divf %88, %89 : vector<10x1xf32>
    %91 = vector.broadcast %90 : vector<10x1xf32> to vector<10x32xf32>
    %92 = arith.subf %84, %91 : vector<10x32xf32>
    %93 = arith.mulf %92, %92 : vector<10x32xf32>
    %cst_32 = arith.constant dense<0.000000e+00> : vector<10xf32>
    %94 = vector.multi_reduction <add>, %93, %cst_32 [1] : vector<10x32xf32> to vector<10xf32>
    %95 = vector.shape_cast %94 : vector<10xf32> to vector<10x1xf32>
    %cst_33 = arith.constant 3.200000e+01 : f32
    %96 = vector.broadcast %cst_33 : f32 to vector<10x1xf32>
    %97 = arith.divf %95, %96 : vector<10x1xf32>
    %98 = vector.broadcast %90 : vector<10x1xf32> to vector<10x32xf32>
    %99 = arith.subf %84, %98 : vector<10x32xf32>
    %cst_34 = arith.constant 9.99999974E-6 : f32
    %100 = vector.broadcast %cst_34 : f32 to vector<10x1xf32>
    %101 = arith.addf %97, %100 : vector<10x1xf32>
    %102 = math.rsqrt %101 : vector<10x1xf32>
    %103 = vector.broadcast %102 : vector<10x1xf32> to vector<10x32xf32>
    %104 = arith.mulf %99, %103 : vector<10x32xf32>
    %105 = vector.broadcast %85 : vector<1x32xf32> to vector<10x32xf32>
    %106 = arith.mulf %104, %105 : vector<10x32xf32>
    %107 = vector.broadcast %86 : vector<1x32xf32> to vector<10x32xf32>
    %108 = arith.addf %106, %107 : vector<10x32xf32>
    %c0_35 = arith.constant 0 : index
    %c768 = arith.constant 768 : index
    %109 = vector.load %arg1[%c0_35, %c768] : memref<32x1792xf32, #tpu.memory_space<vmem>>, vector<32x128xf32>
    %cst_36 = arith.constant dense<0.000000e+00> : vector<10x128xf32>
    %110 = tpu.matmul %108, %109, %cst_36 {dimension_numbers = #tpu.dot_dimension_numbers<[1], [0], [0], [1], [0, 0, 1, 1], [], []>} : vector<10x32xf32>, vector<32x128xf32>, vector<10x128xf32> -> vector<10x128xf32>
    %c4 = arith.constant 4 : index
    %c0_37 = arith.constant 0 : index
    %111 = vector.load %arg3[%c4, %c0_37] : memref<56x768xf32, #tpu.memory_space<vmem>>, vector<1x128xf32>
    %112 = vector.broadcast %111 : vector<1x128xf32> to vector<10x128xf32>
    %113 = arith.addf %110, %112 : vector<10x128xf32>
    %114 = arith.mulf %113, %113 : vector<10x128xf32>
    %115 = arith.mulf %113, %114 : vector<10x128xf32>
    %cst_38 = arith.constant 4.471500e-02 : f32
    %116 = vector.broadcast %cst_38 : f32 to vector<10x128xf32>
    %117 = arith.mulf %116, %115 : vector<10x128xf32>
    %118 = arith.addf %113, %117 : vector<10x128xf32>
    %cst_39 = arith.constant 0.797884583 : f32
    %119 = vector.broadcast %cst_39 : f32 to vector<10x128xf32>
    %120 = arith.mulf %119, %118 : vector<10x128xf32>
    %121 = math.tanh %120 : vector<10x128xf32>
    %cst_40 = arith.constant 1.000000e+00 : f32
    %122 = vector.broadcast %cst_40 : f32 to vector<10x128xf32>
    %123 = arith.addf %122, %121 : vector<10x128xf32>
    %cst_41 = arith.constant 5.000000e-01 : f32
    %124 = vector.broadcast %cst_41 : f32 to vector<10x128xf32>
    %125 = arith.mulf %124, %123 : vector<10x128xf32>
    %126 = arith.mulf %113, %125 : vector<10x128xf32>
    %c512 = arith.constant 512 : index
    %c0_42 = arith.constant 0 : index
    %127 = vector.load %arg2[%c512, %c0_42] : memref<1280x128xf32, #tpu.memory_space<vmem>>, vector<128x32xf32>
    %cst_43 = arith.constant dense<0.000000e+00> : vector<10x32xf32>
    %128 = tpu.matmul %126, %127, %cst_43 {dimension_numbers = #tpu.dot_dimension_numbers<[1], [0], [0], [1], [0, 0, 1, 1], [], []>} : vector<10x128xf32>, vector<128x32xf32>, vector<10x32xf32> -> vector<10x32xf32>
    %c5 = arith.constant 5 : index
    %c0_44 = arith.constant 0 : index
    %129 = vector.load %arg3[%c5, %c0_44] : memref<56x768xf32, #tpu.memory_space<vmem>>, vector<1x32xf32>
    %130 = vector.broadcast %129 : vector<1x32xf32> to vector<10x32xf32>
    %131 = arith.addf %128, %130 : vector<10x32xf32>
    %132 = arith.addf %108, %131 : vector<10x32xf32>
    %c6 = arith.constant 6 : index
    %c0_45 = arith.constant 0 : index
    %133 = vector.load %arg3[%c6, %c0_45] : memref<56x768xf32, #tpu.memory_space<vmem>>, vector<1x32xf32>
    %c7 = arith.constant 7 : index
    %c0_46 = arith.constant 0 : index
    %134 = vector.load %arg3[%c7, %c0_46] : memref<56x768xf32, #tpu.memory_space<vmem>>, vector<1x32xf32>
    %cst_47 = arith.constant dense<0.000000e+00> : vector<10xf32>
    %135 = vector.multi_reduction <add>, %132, %cst_47 [1] : vector<10x32xf32> to vector<10xf32>
    %136 = vector.shape_cast %135 : vector<10xf32> to vector<10x1xf32>
    %cst_48 = arith.constant 3.200000e+01 : f32
    %137 = vector.broadcast %cst_48 : f32 to vector<10x1xf32>
    %138 = arith.divf %136, %137 : vector<10x1xf32>
    %139 = vector.broadcast %138 : vector<10x1xf32> to vector<10x32xf32>
    %140 = arith.subf %132, %139 : vector<10x32xf32>
    %141 = arith.mulf %140, %140 : vector<10x32xf32>
    %cst_49 = arith.constant dense<0.000000e+00> : vector<10xf32>
    %142 = vector.multi_reduction <add>, %141, %cst_49 [1] : vector<10x32xf32> to vector<10xf32>
    %143 = vector.shape_cast %142 : vector<10xf32> to vector<10x1xf32>
    %cst_50 = arith.constant 3.200000e+01 : f32
    %144 = vector.broadcast %cst_50 : f32 to vector<10x1xf32>
    %145 = arith.divf %143, %144 : vector<10x1xf32>
    %146 = vector.broadcast %138 : vector<10x1xf32> to vector<10x32xf32>
    %147 = arith.subf %132, %146 : vector<10x32xf32>
    %cst_51 = arith.constant 9.99999974E-6 : f32
    %148 = vector.broadcast %cst_51 : f32 to vector<10x1xf32>
    %149 = arith.addf %145, %148 : vector<10x1xf32>
    %150 = math.rsqrt %149 : vector<10x1xf32>
    %151 = vector.broadcast %150 : vector<10x1xf32> to vector<10x32xf32>
    %152 = arith.mulf %147, %151 : vector<10x32xf32>
    %153 = vector.broadcast %133 : vector<1x32xf32> to vector<10x32xf32>
    %154 = arith.mulf %152, %153 : vector<10x32xf32>
    %155 = vector.broadcast %134 : vector<1x32xf32> to vector<10x32xf32>
    %156 = arith.addf %154, %155 : vector<10x32xf32>
    %c8 = arith.constant 8 : index
    %c0_52 = arith.constant 0 : index
    %157 = vector.load %arg3[%c8, %c0_52] : memref<56x768xf32, #tpu.memory_space<vmem>>, vector<1x32xf32>
    %c9 = arith.constant 9 : index
    %c0_53 = arith.constant 0 : index
    %158 = vector.load %arg3[%c9, %c0_53] : memref<56x768xf32, #tpu.memory_space<vmem>>, vector<1x32xf32>
    %cst_54 = arith.constant dense<0.000000e+00> : vector<10xf32>
    %159 = vector.multi_reduction <add>, %156, %cst_54 [1] : vector<10x32xf32> to vector<10xf32>
    %160 = vector.shape_cast %159 : vector<10xf32> to vector<10x1xf32>
    %cst_55 = arith.constant 3.200000e+01 : f32
    %161 = vector.broadcast %cst_55 : f32 to vector<10x1xf32>
    %162 = arith.divf %160, %161 : vector<10x1xf32>
    %163 = vector.broadcast %162 : vector<10x1xf32> to vector<10x32xf32>
    %164 = arith.subf %156, %163 : vector<10x32xf32>
    %165 = arith.mulf %164, %164 : vector<10x32xf32>
    %cst_56 = arith.constant dense<0.000000e+00> : vector<10xf32>
    %166 = vector.multi_reduction <add>, %165, %cst_56 [1] : vector<10x32xf32> to vector<10xf32>
    %167 = vector.shape_cast %166 : vector<10xf32> to vector<10x1xf32>
    %cst_57 = arith.constant 3.200000e+01 : f32
    %168 = vector.broadcast %cst_57 : f32 to vector<10x1xf32>
    %169 = arith.divf %167, %168 : vector<10x1xf32>
    %170 = vector.broadcast %162 : vector<10x1xf32> to vector<10x32xf32>
    %171 = arith.subf %156, %170 : vector<10x32xf32>
    %cst_58 = arith.constant 9.99999974E-6 : f32
    %172 = vector.broadcast %cst_58 : f32 to vector<10x1xf32>
    %173 = arith.addf %169, %172 : vector<10x1xf32>
    %174 = math.rsqrt %173 : vector<10x1xf32>
    %175 = vector.broadcast %174 : vector<10x1xf32> to vector<10x32xf32>
    %176 = arith.mulf %171, %175 : vector<10x32xf32>
    %177 = vector.broadcast %157 : vector<1x32xf32> to vector<10x32xf32>
    %178 = arith.mulf %176, %177 : vector<10x32xf32>
    %179 = vector.broadcast %158 : vector<1x32xf32> to vector<10x32xf32>
    %180 = arith.addf %178, %179 : vector<10x32xf32>
    %c0_59 = arith.constant 0 : index
    %c896 = arith.constant 896 : index
    %181 = vector.load %arg1[%c0_59, %c896] : memref<32x1792xf32, #tpu.memory_space<vmem>>, vector<32x512xf32>
    %cst_60 = arith.constant dense<0.000000e+00> : vector<10x512xf32>
    %182 = tpu.matmul %180, %181, %cst_60 {dimension_numbers = #tpu.dot_dimension_numbers<[1], [0], [0], [1], [0, 0, 1, 1], [], []>} : vector<10x32xf32>, vector<32x512xf32>, vector<10x512xf32> -> vector<10x512xf32>
    %c10 = arith.constant 10 : index
    %c0_61 = arith.constant 0 : index
    %183 = vector.load %arg3[%c10, %c0_61] : memref<56x768xf32, #tpu.memory_space<vmem>>, vector<1x512xf32>
    %184 = vector.broadcast %183 : vector<1x512xf32> to vector<10x512xf32>
    %185 = arith.addf %182, %184 : vector<10x512xf32>
    %c46 = arith.constant 46 : index
    %c0_62 = arith.constant 0 : index
    %186 = vector.load %arg3[%c46, %c0_62] : memref<56x768xf32, #tpu.memory_space<vmem>>, vector<8x256xf32>
    %c30 = arith.constant 30 : index
    %c0_63 = arith.constant 0 : index
    %187 = vector.load %arg3[%c30, %c0_63] : memref<56x768xf32, #tpu.memory_space<vmem>>, vector<16x32xf32>
    %c640 = arith.constant 640 : index
    %c0_64 = arith.constant 0 : index
    %188 = vector.load %arg2[%c640, %c0_64] : memref<1280x128xf32, #tpu.memory_space<vmem>>, vector<256x32xf32>
    %c11 = arith.constant 11 : index
    %c0_65 = arith.constant 0 : index
    %189 = vector.load %arg3[%c11, %c0_65] : memref<56x768xf32, #tpu.memory_space<vmem>>, vector<1x32xf32>
    %190 = vector.extract_strided_slice %185 {offsets = [0, 0], sizes = [5, 512], strides = [1, 1]} : vector<10x512xf32> to vector<5x512xf32>
    %191 = vector.extract_strided_slice %186 {offsets = [0, 0], sizes = [8, 128], strides = [1, 1]} : vector<8x256xf32> to vector<8x128xf32>
    %192 = vector.extract_strided_slice %190 {offsets = [0, 0], sizes = [5, 128], strides = [1, 1]} : vector<5x512xf32> to vector<5x128xf32>
    %193 = vector.extract_strided_slice %190 {offsets = [0, 256], sizes = [5, 128], strides = [1, 1]} : vector<5x512xf32> to vector<5x128xf32>
    %cst_66 = arith.constant dense<0.000000e+00> : vector<8x5xf32>
    %194 = tpu.matmul %191, %192, %cst_66 {dimension_numbers = #tpu.dot_dimension_numbers<[1], [1], [0], [0], [0, 0, 1, 0], [], []>} : vector<8x128xf32>, vector<5x128xf32>, vector<8x5xf32> -> vector<8x5xf32>
    %cst_67 = arith.constant dense<0xFF800000> : vector<8xf32>
    %195 = vector.multi_reduction <maximumf>, %194, %cst_67 [1] : vector<8x5xf32> to vector<8xf32>
    %196 = vector.shape_cast %195 : vector<8xf32> to vector<8x1xf32>
    %197 = vector.broadcast %196 : vector<8x1xf32> to vector<8x5xf32>
    %198 = arith.subf %194, %197 : vector<8x5xf32>
    %199 = math.exp %198 : vector<8x5xf32>
    %cst_68 = arith.constant dense<0.000000e+00> : vector<8xf32>
    %200 = vector.multi_reduction <add>, %199, %cst_68 [1] : vector<8x5xf32> to vector<8xf32>
    %201 = vector.shape_cast %200 : vector<8xf32> to vector<8x1xf32>
    %202 = tpu.reciprocal %201 {approx = true} : vector<8x1xf32> -> vector<8x1xf32>
    %203 = vector.broadcast %202 : vector<8x1xf32> to vector<8x5xf32>
    %204 = arith.mulf %199, %203 : vector<8x5xf32>
    %cst_69 = arith.constant dense<0.000000e+00> : vector<8x128xf32>
    %205 = tpu.matmul %204, %193, %cst_69 {dimension_numbers = #tpu.dot_dimension_numbers<[1], [0], [0], [1], [0, 0, 1, 1], [], []>} : vector<8x5xf32>, vector<5x128xf32>, vector<8x128xf32> -> vector<8x128xf32>
    %206 = vector.extract_strided_slice %186 {offsets = [0, 128], sizes = [8, 128], strides = [1, 1]} : vector<8x256xf32> to vector<8x128xf32>
    %207 = vector.extract_strided_slice %190 {offsets = [0, 128], sizes = [5, 128], strides = [1, 1]} : vector<5x512xf32> to vector<5x128xf32>
    %208 = vector.extract_strided_slice %190 {offsets = [0, 384], sizes = [5, 128], strides = [1, 1]} : vector<5x512xf32> to vector<5x128xf32>
    %cst_70 = arith.constant dense<0.000000e+00> : vector<8x5xf32>
    %209 = tpu.matmul %206, %207, %cst_70 {dimension_numbers = #tpu.dot_dimension_numbers<[1], [1], [0], [0], [0, 0, 1, 0], [], []>} : vector<8x128xf32>, vector<5x128xf32>, vector<8x5xf32> -> vector<8x5xf32>
    %cst_71 = arith.constant dense<0xFF800000> : vector<8xf32>
    %210 = vector.multi_reduction <maximumf>, %209, %cst_71 [1] : vector<8x5xf32> to vector<8xf32>
    %211 = vector.shape_cast %210 : vector<8xf32> to vector<8x1xf32>
    %212 = vector.broadcast %211 : vector<8x1xf32> to vector<8x5xf32>
    %213 = arith.subf %209, %212 : vector<8x5xf32>
    %214 = math.exp %213 : vector<8x5xf32>
    %cst_72 = arith.constant dense<0.000000e+00> : vector<8xf32>
    %215 = vector.multi_reduction <add>, %214, %cst_72 [1] : vector<8x5xf32> to vector<8xf32>
    %216 = vector.shape_cast %215 : vector<8xf32> to vector<8x1xf32>
    %217 = tpu.reciprocal %216 {approx = true} : vector<8x1xf32> -> vector<8x1xf32>
    %218 = vector.broadcast %217 : vector<8x1xf32> to vector<8x5xf32>
    %219 = arith.mulf %214, %218 : vector<8x5xf32>
    %cst_73 = arith.constant dense<0.000000e+00> : vector<8x128xf32>
    %220 = tpu.matmul %219, %208, %cst_73 {dimension_numbers = #tpu.dot_dimension_numbers<[1], [0], [0], [1], [0, 0, 1, 1], [], []>} : vector<8x5xf32>, vector<5x128xf32>, vector<8x128xf32> -> vector<8x128xf32>
    %221 = tpu.concatenate %205, %220 in 1 : vector<8x128xf32>, vector<8x128xf32> -> vector<8x256xf32>
    %222 = vector.extract_strided_slice %185 {offsets = [5, 0], sizes = [5, 512], strides = [1, 1]} : vector<10x512xf32> to vector<5x512xf32>
    %223 = vector.extract_strided_slice %186 {offsets = [0, 0], sizes = [8, 128], strides = [1, 1]} : vector<8x256xf32> to vector<8x128xf32>
    %224 = vector.extract_strided_slice %222 {offsets = [0, 0], sizes = [5, 128], strides = [1, 1]} : vector<5x512xf32> to vector<5x128xf32>
    %225 = vector.extract_strided_slice %222 {offsets = [0, 256], sizes = [5, 128], strides = [1, 1]} : vector<5x512xf32> to vector<5x128xf32>
    %cst_74 = arith.constant dense<0.000000e+00> : vector<8x5xf32>
    %226 = tpu.matmul %223, %224, %cst_74 {dimension_numbers = #tpu.dot_dimension_numbers<[1], [1], [0], [0], [0, 0, 1, 0], [], []>} : vector<8x128xf32>, vector<5x128xf32>, vector<8x5xf32> -> vector<8x5xf32>
    %cst_75 = arith.constant dense<0xFF800000> : vector<8xf32>
    %227 = vector.multi_reduction <maximumf>, %226, %cst_75 [1] : vector<8x5xf32> to vector<8xf32>
    %228 = vector.shape_cast %227 : vector<8xf32> to vector<8x1xf32>
    %229 = vector.broadcast %228 : vector<8x1xf32> to vector<8x5xf32>
    %230 = arith.subf %226, %229 : vector<8x5xf32>
    %231 = math.exp %230 : vector<8x5xf32>
    %cst_76 = arith.constant dense<0.000000e+00> : vector<8xf32>
    %232 = vector.multi_reduction <add>, %231, %cst_76 [1] : vector<8x5xf32> to vector<8xf32>
    %233 = vector.shape_cast %232 : vector<8xf32> to vector<8x1xf32>
    %234 = tpu.reciprocal %233 {approx = true} : vector<8x1xf32> -> vector<8x1xf32>
    %235 = vector.broadcast %234 : vector<8x1xf32> to vector<8x5xf32>
    %236 = arith.mulf %231, %235 : vector<8x5xf32>
    %cst_77 = arith.constant dense<0.000000e+00> : vector<8x128xf32>
    %237 = tpu.matmul %236, %225, %cst_77 {dimension_numbers = #tpu.dot_dimension_numbers<[1], [0], [0], [1], [0, 0, 1, 1], [], []>} : vector<8x5xf32>, vector<5x128xf32>, vector<8x128xf32> -> vector<8x128xf32>
    %238 = vector.extract_strided_slice %186 {offsets = [0, 128], sizes = [8, 128], strides = [1, 1]} : vector<8x256xf32> to vector<8x128xf32>
    %239 = vector.extract_strided_slice %222 {offsets = [0, 128], sizes = [5, 128], strides = [1, 1]} : vector<5x512xf32> to vector<5x128xf32>
    %240 = vector.extract_strided_slice %222 {offsets = [0, 384], sizes = [5, 128], strides = [1, 1]} : vector<5x512xf32> to vector<5x128xf32>
    %cst_78 = arith.constant dense<0.000000e+00> : vector<8x5xf32>
    %241 = tpu.matmul %238, %239, %cst_78 {dimension_numbers = #tpu.dot_dimension_numbers<[1], [1], [0], [0], [0, 0, 1, 0], [], []>} : vector<8x128xf32>, vector<5x128xf32>, vector<8x5xf32> -> vector<8x5xf32>
    %cst_79 = arith.constant dense<0xFF800000> : vector<8xf32>
    %242 = vector.multi_reduction <maximumf>, %241, %cst_79 [1] : vector<8x5xf32> to vector<8xf32>
    %243 = vector.shape_cast %242 : vector<8xf32> to vector<8x1xf32>
    %244 = vector.broadcast %243 : vector<8x1xf32> to vector<8x5xf32>
    %245 = arith.subf %241, %244 : vector<8x5xf32>
    %246 = math.exp %245 : vector<8x5xf32>
    %cst_80 = arith.constant dense<0.000000e+00> : vector<8xf32>
    %247 = vector.multi_reduction <add>, %246, %cst_80 [1] : vector<8x5xf32> to vector<8xf32>
    %248 = vector.shape_cast %247 : vector<8xf32> to vector<8x1xf32>
    %249 = tpu.reciprocal %248 {approx = true} : vector<8x1xf32> -> vector<8x1xf32>
    %250 = vector.broadcast %249 : vector<8x1xf32> to vector<8x5xf32>
    %251 = arith.mulf %246, %250 : vector<8x5xf32>
    %cst_81 = arith.constant dense<0.000000e+00> : vector<8x128xf32>
    %252 = tpu.matmul %251, %240, %cst_81 {dimension_numbers = #tpu.dot_dimension_numbers<[1], [0], [0], [1], [0, 0, 1, 1], [], []>} : vector<8x5xf32>, vector<5x128xf32>, vector<8x128xf32> -> vector<8x128xf32>
    %253 = tpu.concatenate %237, %252 in 1 : vector<8x128xf32>, vector<8x128xf32> -> vector<8x256xf32>
    %254 = tpu.concatenate %221, %253 in 0 : vector<8x256xf32>, vector<8x256xf32> -> vector<16x256xf32>
    %cst_82 = arith.constant dense<0.000000e+00> : vector<16x32xf32>
    %255 = tpu.matmul %254, %188, %cst_82 {dimension_numbers = #tpu.dot_dimension_numbers<[1], [0], [0], [1], [0, 0, 1, 1], [], []>} : vector<16x256xf32>, vector<256x32xf32>, vector<16x32xf32> -> vector<16x32xf32>
    %256 = vector.broadcast %189 : vector<1x32xf32> to vector<16x32xf32>
    %257 = arith.addf %255, %256 : vector<16x32xf32>
    %258 = arith.addf %187, %257 : vector<16x32xf32>
    %c12 = arith.constant 12 : index
    %c0_83 = arith.constant 0 : index
    %259 = vector.load %arg3[%c12, %c0_83] : memref<56x768xf32, #tpu.memory_space<vmem>>, vector<1x32xf32>
    %c13 = arith.constant 13 : index
    %c0_84 = arith.constant 0 : index
    %260 = vector.load %arg3[%c13, %c0_84] : memref<56x768xf32, #tpu.memory_space<vmem>>, vector<1x32xf32>
    %cst_85 = arith.constant dense<0.000000e+00> : vector<16xf32>
    %261 = vector.multi_reduction <add>, %258, %cst_85 [1] : vector<16x32xf32> to vector<16xf32>
    %262 = vector.shape_cast %261 : vector<16xf32> to vector<16x1xf32>
    %cst_86 = arith.constant 3.200000e+01 : f32
    %263 = vector.broadcast %cst_86 : f32 to vector<16x1xf32>
    %264 = arith.divf %262, %263 : vector<16x1xf32>
    %265 = vector.broadcast %264 : vector<16x1xf32> to vector<16x32xf32>
    %266 = arith.subf %258, %265 : vector<16x32xf32>
    %267 = arith.mulf %266, %266 : vector<16x32xf32>
    %cst_87 = arith.constant dense<0.000000e+00> : vector<16xf32>
    %268 = vector.multi_reduction <add>, %267, %cst_87 [1] : vector<16x32xf32> to vector<16xf32>
    %269 = vector.shape_cast %268 : vector<16xf32> to vector<16x1xf32>
    %cst_88 = arith.constant 3.200000e+01 : f32
    %270 = vector.broadcast %cst_88 : f32 to vector<16x1xf32>
    %271 = arith.divf %269, %270 : vector<16x1xf32>
    %272 = vector.broadcast %264 : vector<16x1xf32> to vector<16x32xf32>
    %273 = arith.subf %258, %272 : vector<16x32xf32>
    %cst_89 = arith.constant 9.99999996E-13 : f32
    %274 = vector.broadcast %cst_89 : f32 to vector<16x1xf32>
    %275 = arith.addf %271, %274 : vector<16x1xf32>
    %276 = math.rsqrt %275 : vector<16x1xf32>
    %277 = vector.broadcast %276 : vector<16x1xf32> to vector<16x32xf32>
    %278 = arith.mulf %273, %277 : vector<16x32xf32>
    %279 = vector.broadcast %259 : vector<1x32xf32> to vector<16x32xf32>
    %280 = arith.mulf %278, %279 : vector<16x32xf32>
    %281 = vector.broadcast %260 : vector<1x32xf32> to vector<16x32xf32>
    %282 = arith.addf %280, %281 : vector<16x32xf32>
    %c0_90 = arith.constant 0 : index
    %c1408 = arith.constant 1408 : index
    %283 = vector.load %arg1[%c0_90, %c1408] : memref<32x1792xf32, #tpu.memory_space<vmem>>, vector<32x128xf32>
    %cst_91 = arith.constant dense<0.000000e+00> : vector<16x128xf32>
    %284 = tpu.matmul %282, %283, %cst_91 {dimension_numbers = #tpu.dot_dimension_numbers<[1], [0], [0], [1], [0, 0, 1, 1], [], []>} : vector<16x32xf32>, vector<32x128xf32>, vector<16x128xf32> -> vector<16x128xf32>
    %c14 = arith.constant 14 : index
    %c0_92 = arith.constant 0 : index
    %285 = vector.load %arg3[%c14, %c0_92] : memref<56x768xf32, #tpu.memory_space<vmem>>, vector<1x128xf32>
    %286 = vector.broadcast %285 : vector<1x128xf32> to vector<16x128xf32>
    %287 = arith.addf %284, %286 : vector<16x128xf32>
    %288 = arith.mulf %287, %287 : vector<16x128xf32>
    %289 = arith.mulf %287, %288 : vector<16x128xf32>
    %cst_93 = arith.constant 4.471500e-02 : f32
    %290 = vector.broadcast %cst_93 : f32 to vector<16x128xf32>
    %291 = arith.mulf %290, %289 : vector<16x128xf32>
    %292 = arith.addf %287, %291 : vector<16x128xf32>
    %cst_94 = arith.constant 0.797884583 : f32
    %293 = vector.broadcast %cst_94 : f32 to vector<16x128xf32>
    %294 = arith.mulf %293, %292 : vector<16x128xf32>
    %295 = math.tanh %294 : vector<16x128xf32>
    %cst_95 = arith.constant 1.000000e+00 : f32
    %296 = vector.broadcast %cst_95 : f32 to vector<16x128xf32>
    %297 = arith.addf %296, %295 : vector<16x128xf32>
    %cst_96 = arith.constant 5.000000e-01 : f32
    %298 = vector.broadcast %cst_96 : f32 to vector<16x128xf32>
    %299 = arith.mulf %298, %297 : vector<16x128xf32>
    %300 = arith.mulf %287, %299 : vector<16x128xf32>
    %c896_97 = arith.constant 896 : index
    %c0_98 = arith.constant 0 : index
    %301 = vector.load %arg2[%c896_97, %c0_98] : memref<1280x128xf32, #tpu.memory_space<vmem>>, vector<128x32xf32>
    %cst_99 = arith.constant dense<0.000000e+00> : vector<16x32xf32>
    %302 = tpu.matmul %300, %301, %cst_99 {dimension_numbers = #tpu.dot_dimension_numbers<[1], [0], [0], [1], [0, 0, 1, 1], [], []>} : vector<16x128xf32>, vector<128x32xf32>, vector<16x32xf32> -> vector<16x32xf32>
    %c15 = arith.constant 15 : index
    %c0_100 = arith.constant 0 : index
    %303 = vector.load %arg3[%c15, %c0_100] : memref<56x768xf32, #tpu.memory_space<vmem>>, vector<1x32xf32>
    %304 = vector.broadcast %303 : vector<1x32xf32> to vector<16x32xf32>
    %305 = arith.addf %302, %304 : vector<16x32xf32>
    %306 = arith.addf %282, %305 : vector<16x32xf32>
    %c16 = arith.constant 16 : index
    %c0_101 = arith.constant 0 : index
    %307 = vector.load %arg3[%c16, %c0_101] : memref<56x768xf32, #tpu.memory_space<vmem>>, vector<1x32xf32>
    %c17 = arith.constant 17 : index
    %c0_102 = arith.constant 0 : index
    %308 = vector.load %arg3[%c17, %c0_102] : memref<56x768xf32, #tpu.memory_space<vmem>>, vector<1x32xf32>
    %cst_103 = arith.constant dense<0.000000e+00> : vector<16xf32>
    %309 = vector.multi_reduction <add>, %306, %cst_103 [1] : vector<16x32xf32> to vector<16xf32>
    %310 = vector.shape_cast %309 : vector<16xf32> to vector<16x1xf32>
    %cst_104 = arith.constant 3.200000e+01 : f32
    %311 = vector.broadcast %cst_104 : f32 to vector<16x1xf32>
    %312 = arith.divf %310, %311 : vector<16x1xf32>
    %313 = vector.broadcast %312 : vector<16x1xf32> to vector<16x32xf32>
    %314 = arith.subf %306, %313 : vector<16x32xf32>
    %315 = arith.mulf %314, %314 : vector<16x32xf32>
    %cst_105 = arith.constant dense<0.000000e+00> : vector<16xf32>
    %316 = vector.multi_reduction <add>, %315, %cst_105 [1] : vector<16x32xf32> to vector<16xf32>
    %317 = vector.shape_cast %316 : vector<16xf32> to vector<16x1xf32>
    %cst_106 = arith.constant 3.200000e+01 : f32
    %318 = vector.broadcast %cst_106 : f32 to vector<16x1xf32>
    %319 = arith.divf %317, %318 : vector<16x1xf32>
    %320 = vector.broadcast %312 : vector<16x1xf32> to vector<16x32xf32>
    %321 = arith.subf %306, %320 : vector<16x32xf32>
    %cst_107 = arith.constant 9.99999996E-13 : f32
    %322 = vector.broadcast %cst_107 : f32 to vector<16x1xf32>
    %323 = arith.addf %319, %322 : vector<16x1xf32>
    %324 = math.rsqrt %323 : vector<16x1xf32>
    %325 = vector.broadcast %324 : vector<16x1xf32> to vector<16x32xf32>
    %326 = arith.mulf %321, %325 : vector<16x32xf32>
    %327 = vector.broadcast %307 : vector<1x32xf32> to vector<16x32xf32>
    %328 = arith.mulf %326, %327 : vector<16x32xf32>
    %329 = vector.broadcast %308 : vector<1x32xf32> to vector<16x32xf32>
    %330 = arith.addf %328, %329 : vector<16x32xf32>
    %331 = vector.extract_strided_slice %330 {offsets = [0, 0], sizes = [1, 32], strides = [1, 1]} : vector<16x32xf32> to vector<1x32xf32>
    %332 = vector.extract_strided_slice %330 {offsets = [8, 0], sizes = [1, 32], strides = [1, 1]} : vector<16x32xf32> to vector<1x32xf32>
    %333 = tpu.concatenate %331, %332 in 0 : vector<1x32xf32>, vector<1x32xf32> -> vector<2x32xf32>
    %c0_108 = arith.constant 0 : index
    %c1536 = arith.constant 1536 : index
    %334 = vector.load %arg1[%c0_108, %c1536] : memref<32x1792xf32, #tpu.memory_space<vmem>>, vector<32x256xf32>
    %cst_109 = arith.constant dense<0.000000e+00> : vector<2x256xf32>
    %335 = tpu.matmul %333, %334, %cst_109 {dimension_numbers = #tpu.dot_dimension_numbers<[1], [0], [0], [1], [0, 0, 1, 1], [], []>} : vector<2x32xf32>, vector<32x256xf32>, vector<2x256xf32> -> vector<2x256xf32>
    %c18 = arith.constant 18 : index
    %c0_110 = arith.constant 0 : index
    %336 = vector.load %arg3[%c18, %c0_110] : memref<56x768xf32, #tpu.memory_space<vmem>>, vector<1x256xf32>
    %337 = vector.broadcast %336 : vector<1x256xf32> to vector<2x256xf32>
    %338 = arith.addf %335, %337 : vector<2x256xf32>
    %cst_111 = arith.constant 0.000000e+00 : f32
    %339 = vector.broadcast %cst_111 : f32 to vector<2x256xf32>
    %340 = arith.maximumf %338, %339 : vector<2x256xf32>
    %c1024 = arith.constant 1024 : index
    %c0_112 = arith.constant 0 : index
    %341 = vector.load %arg2[%c1024, %c0_112] : memref<1280x128xf32, #tpu.memory_space<vmem>>, vector<256x128xf32>
    %cst_113 = arith.constant dense<0.000000e+00> : vector<2x128xf32>
    %342 = tpu.matmul %340, %341, %cst_113 {dimension_numbers = #tpu.dot_dimension_numbers<[1], [0], [0], [1], [0, 0, 1, 1], [], []>} : vector<2x256xf32>, vector<256x128xf32>, vector<2x128xf32> -> vector<2x128xf32>
    %c19 = arith.constant 19 : index
    %c0_114 = arith.constant 0 : index
    %343 = vector.load %arg3[%c19, %c0_114] : memref<56x768xf32, #tpu.memory_space<vmem>>, vector<1x128xf32>
    %344 = vector.broadcast %343 : vector<1x128xf32> to vector<2x128xf32>
    %345 = arith.addf %342, %344 : vector<2x128xf32>
    %c0_115 = arith.constant 0 : index
    %c0_116 = arith.constant 0 : index
    %346 = vector.load %arg4[%c0_115, %c0_116] : memref<2x128xf32, #tpu.memory_space<vmem>>, vector<2x128xf32>
    tpu.vector_store %arg4[%c0_115, %c0_116], %345 {strides = array<i32>} : memref<2x128xf32, #tpu.memory_space<vmem>>, vector<2x128xf32>,
    return
  }
}

</mosaic_0001>

<llo_original>
// kernel: blip_with_metrics_head_forward.1
$region0: #{blip_with_metrics_head_forward.1}
  #allocation0 [shape = 'u32[]', space=smem, size = 0x4, offset = 0x4, fixed_abs, tag = 'smem constant byte address 0x4 - core index']
  #allocation1 [shape = 'u32[72,128]{1,0:T(1,128)}', space=vmem, size = 0x9000, scoped, tag = 'internal scratch']
  %s0 = inlined_call_operand.vmem [shape: f32[10,256], index: 0, kind: input, shape index: {}]
  %s1 = inlined_call_operand.vmem [shape: f32[32,1792], index: 1, kind: input, shape index: {}]
  %s2 = inlined_call_operand.hbm [shape: f32[1280,128], index: 2, kind: input, shape index: {}]
  %s3 = inlined_call_operand.vmem [shape: f32[56,768], index: 3, kind: input, shape index: {}]
  %s4 = inlined_call_operand.hbm [shape: f32[2,128], index: 4, kind: output, shape index: {}]
  %s5 = sld [smem:[#allocation0]]
  $region30: #{blip_with_metrics_head_forward.1} parent=0
    _
  %s7 = ssub.s32 1, %s5
  %s8 = scalar_select 0, %s7, %s5
  $region1: #{blip_with_metrics_head_forward.1} parent=0
    #allocation2 [shape = 'u8[655360]{0}', space=vmem, size = 0xa0000, scoped, tag = 'input window, operand 2, single buffered']
    #allocation3 [shape = 's32[1]{0}', space=sflag, size = 0x4, scoped, tag = 'scoped memory for blip_with_metrics_head_forward.1']
    #allocation4 [shape = 's32[1]{0}', space=sflag, size = 0x4, scoped, tag = 'scoped memory for blip_with_metrics_head_forward.1']
    #allocation5 [shape = 'u8[1024]{0}', space=vmem, size = 0x400, scoped, tag = 'output window, operand 0, single buffered']
    %9 = vsyncpa [#allocation3], 0
    %10 = vsyncpa [#allocation4], 0
    // Predicated region
    $region2: #{blip_with_metrics_head_forward.1} parent=1 // pred_check
      _
    $region3: #{blip_with_metrics_head_forward.1} parent=1 // pred_check_branch
      %12 = sbr.rel (0) target = $region5
    $region4: #{blip_with_metrics_head_forward.1} parent=1 // pred_region
      _
    $region5: #{blip_with_metrics_head_forward.1} parent=1 // pred_fallthru
      _
    // Predicated region
    $region6: #{blip_with_metrics_head_forward.1} parent=1 // pred_check
      _
    $region7: #{blip_with_metrics_head_forward.1} parent=1 // pred_check_branch
      %14 = sbr.rel (0) target = $region9
    $region8: #{blip_with_metrics_head_forward.1} parent=1 // pred_region
      _
    $region9: #{blip_with_metrics_head_forward.1} parent=1 // pred_fallthru
      _
    // Predicated region
    $region10: #{blip_with_metrics_head_forward.1} parent=1 // pred_check
      _
    $region11: #{blip_with_metrics_head_forward.1} parent=1 // pred_check_branch
      %16 = sbr.rel (0) target = $region13
    $region12: #{blip_with_metrics_head_forward.1} parent=1 // pred_region
      %18 = vsyncadd [#allocation3], 0
      %s19 = sshll.u32 %s2, 4
      %s20 = int_to_ptr.hbm [resolvable:$true] %s19
      %s21 = sshll.u32 [#allocation2], 4
      %s22 = int_to_ptr.vmem [resolvable:$true] %s21
      %27 = dma.hbm_to_vmem [thread:$0]  %s20, 20480, %s22, [#allocation3], 128, 128, 8
    $region13: #{blip_with_metrics_head_forward.1} parent=1 // pred_fallthru
      _
    // Predicated region
    $region14: #{blip_with_metrics_head_forward.1} parent=1 // pred_check
      _
    $region15: #{blip_with_metrics_head_forward.1} parent=1 // pred_check_branch
      %29 = sbr.rel (0) target = $region17
    $region16: #{blip_with_metrics_head_forward.1} parent=1 // pred_region
      _
    $region17: #{blip_with_metrics_head_forward.1} parent=1 // pred_fallthru
      _
    // Predicated region
    $region18: #{blip_with_metrics_head_forward.1} parent=1 // pred_check
      _
    $region19: #{blip_with_metrics_head_forward.1} parent=1 // pred_check_branch
      %31 = sbr.rel (0) target = $region21
    $region20: #{blip_with_metrics_head_forward.1} parent=1 // pred_region
      %33 = dma.done [#allocation3], 20480
    $region21: #{blip_with_metrics_head_forward.1} parent=1 // pred_fallthru
      _
    %v34 = vld [vmem:[%s0] sm:$0xff]
    %v35 = vld [vmem:[%s0 + $0x8] sm:$0xff]
    %v36 = vld [vmem:[%s0 + $0x10] sm:$0x3]
    %v37 = vld [vmem:[%s0 + $0x18] sm:$0x3]
    %v38 = vld [vmem:[#allocation2] sm:$0xff]
    %v39 = vld [vmem:[#allocation2 + $0x8] sm:$0xff]
    %v40 = vld [vmem:[#allocation2 + $0x10] sm:$0xff]
    %v41 = vld [vmem:[#allocation2 + $0x18] sm:$0xff]
    %v42 = vld [vmem:[#allocation2 + $0x20] sm:$0xff]
    %v43 = vld [vmem:[#allocation2 + $0x28] sm:$0xff]
    %v44 = vld [vmem:[#allocation2 + $0x30] sm:$0xff]
    %v45 = vld [vmem:[#allocation2 + $0x38] sm:$0xff]
    %v46 = vld [vmem:[#allocation2 + $0x40] sm:$0xff]
    %v47 = vld [vmem:[#allocation2 + $0x48] sm:$0xff]
    %v48 = vld [vmem:[#allocation2 + $0x50] sm:$0xff]
    %v49 = vld [vmem:[#allocation2 + $0x58] sm:$0xff]
    %v50 = vld [vmem:[#allocation2 + $0x60] sm:$0xff]
    %v51 = vld [vmem:[#allocation2 + $0x68] sm:$0xff]
    %v52 = vld [vmem:[#allocation2 + $0x70] sm:$0xff]
    %v53 = vld [vmem:[#allocation2 + $0x78] sm:$0xff]
    %v54 = vld [vmem:[#allocation2 + $0x80] sm:$0xff]
    %v55 = vld [vmem:[#allocation2 + $0x88] sm:$0xff]
    %v56 = vld [vmem:[#allocation2 + $0x90] sm:$0xff]
    %v57 = vld [vmem:[#allocation2 + $0x98] sm:$0xff]
    %v58 = vld [vmem:[#allocation2 + $0xa0] sm:$0xff]
    %v59 = vld [vmem:[#allocation2 + $0xa8] sm:$0xff]
    %v60 = vld [vmem:[#allocation2 + $0xb0] sm:$0xff]
    %v61 = vld [vmem:[#allocation2 + $0xb8] sm:$0xff]
    %v62 = vld [vmem:[#allocation2 + $0xc0] sm:$0xff]
    %v63 = vld [vmem:[#allocation2 + $0xc8] sm:$0xff]
    %v64 = vld [vmem:[#allocation2 + $0xd0] sm:$0xff]
    %v65 = vld [vmem:[#allocation2 + $0xd8] sm:$0xff]
    %v66 = vld [vmem:[#allocation2 + $0xe0] sm:$0xff]
    %v67 = vld [vmem:[#allocation2 + $0xe8] sm:$0xff]
    %v68 = vld [vmem:[#allocation2 + $0xf0] sm:$0xff]
    %v69 = vld [vmem:[#allocation2 + $0xf8] sm:$0xff]
    %v70 = vld [vmem:[%s3 + $0x60] sm:$0xf0]
    %v71 = vld [vmem:[%s3 + $0x90] sm:$0x3f]
    %vm74 = vcmask 1043456
    %v75 = vrot.slane %v70, 4
    %v76 = vrot.slane %v71, 4
    %v77 = vsel %vm74, %v75, %v76
    %80 = vmatpush.msra.mxu0 %v53
    %81 = vmatpush.msra.mxu0 %v52
    %82 = vmatpush.msra.mxu0 %v51
    %83 = vmatpush.msra.mxu0 %v50
    %84 = vmatpush.msra.mxu0 %v49
    %85 = vmatpush.msra.mxu0 %v48
    %86 = vmatpush.msra.mxu0 %v47
    %87 = vmatpush.msra.mxu0 %v46
    %88 = vmatpush.msra.mxu0 %v45
    %89 = vmatpush.msra.mxu0 %v44
    %90 = vmatpush.msra.mxu0 %v43
    %91 = vmatpush.msra.mxu0 %v42
    %92 = vmatpush.msra.mxu0 %v41
    %93 = vmatpush.msra.mxu0 %v40
    %94 = vmatpush.msra.mxu0 %v39
    %95 = vmatpush.msra.mxu0 %v38
    %96 = vmatmul.f32.gmra.mxu0 %v34
    %v97 = vpop.f32.mrf.mxu0
    %v98 = vadd.f32 %v77, %v97
    %99 = vmatmul.f32.gmra.mxu0 %v36
    %v100 = vpop.f32.mrf.mxu0
    %v101 = vadd.f32 %v76, %v100
    %102 = vdwg.mxu0
    %103 = vmatpush.msra.mxu0 %v69
    %104 = vmatpush.msra.mxu0 %v68
    %105 = vmatpush.msra.mxu0 %v67
    %106 = vmatpush.msra.mxu0 %v66
    %107 = vmatpush.msra.mxu0 %v65
    %108 = vmatpush.msra.mxu0 %v64
    %109 = vmatpush.msra.mxu0 %v63
    %110 = vmatpush.msra.mxu0 %v62
    %111 = vmatpush.msra.mxu0 %v61
    %112 = vmatpush.msra.mxu0 %v60
    %113 = vmatpush.msra.mxu0 %v59
    %114 = vmatpush.msra.mxu0 %v58
    %115 = vmatpush.msra.mxu0 %v57
    %116 = vmatpush.msra.mxu0 %v56
    %117 = vmatpush.msra.mxu0 %v55
    %118 = vmatpush.msra.mxu0 %v54
    %119 = vmatmul.f32.gmra.mxu0 %v35
    %v120 = vpop.f32.mrf.mxu0
    %v121 = vadd.f32 %v98, %v120
    %122 = vmatmul.f32.gmra.mxu0 %v37
    %v123 = vpop.f32.mrf.mxu0
    %v124 = vadd.f32 %v101, %v123
    %125 = vdwg.mxu0
    %v126 = vld [vmem:[%s1] sm:$0xff]
    %v127 = vld [vmem:[%s1 + $0x8] sm:$0xff]
    %v128 = vld [vmem:[%s1 + $0x10] sm:$0xff]
    %v129 = vld [vmem:[%s1 + $0x18] sm:$0xff]
    %v130 = vld [vmem:[%s1 + $0x20] sm:$0xff]
    %v131 = vld [vmem:[%s1 + $0x28] sm:$0xff]
    %v132 = vld [vmem:[%s1 + $0x70] sm:$0xff]
    %v133 = vld [vmem:[%s1 + $0x78] sm:$0xff]
    %v134 = vld [vmem:[%s1 + $0x80] sm:$0xff]
    %v135 = vld [vmem:[%s1 + $0x88] sm:$0xff]
    %v136 = vld [vmem:[%s1 + $0x90] sm:$0xff]
    %v137 = vld [vmem:[%s1 + $0x98] sm:$0xff]
    %v138 = vld [vmem:[%s1 + $0xe0] sm:$0xff]
    %v139 = vld [vmem:[%s1 + $0xe8] sm:$0xff]
    %v140 = vld [vmem:[%s1 + $0xf0] sm:$0xff]
    %v141 = vld [vmem:[%s1 + $0xf8] sm:$0xff]
    %v142 = vld [vmem:[%s1 + $0x100] sm:$0xff]
    %v143 = vld [vmem:[%s1 + $0x108] sm:$0xff]
    %v144 = vld [vmem:[%s1 + $0x150] sm:$0xff]
    %v145 = vld [vmem:[%s1 + $0x158] sm:$0xff]
    %v146 = vld [vmem:[%s1 + $0x160] sm:$0xff]
    %v147 = vld [vmem:[%s1 + $0x168] sm:$0xff]
    %v148 = vld [vmem:[%s1 + $0x170] sm:$0xff]
    %v149 = vld [vmem:[%s1 + $0x178] sm:$0xff]
    %v150 = vld [vmem:[%s3] ss:$8 sm:$0xf]
    %v151 = vld [vmem:[%s3] ss:$8 sm:$0x30]
    %v152 = vor.u32 %v150, %v151
    %v154 = vperm.slane %v152, 0
    %v155 = vperm.slane %v152, 1
    %v156 = vperm.slane %v152, 2
    %v157 = vperm.slane %v152, 3
    %v158 = vperm.slane %v152, 4
    %v159 = vperm.slane %v152, 5
    %vm166 = vcmask 261120
    %v168 = vsel %vm166, %v121, 0
    %v171 = vsel %vm166, %v124, 0
    %173 = vmatpush.msra.mxu0 0.0
    %174 = vmatpush.msra.mxu0 0.0
    %175 = vmatpush.msra.mxu0 0.0
    %176 = vmatpush.msra.mxu0 0.0
    %177 = vmatpush.msra.mxu0 0.0
    %178 = vmatpush.msra.mxu0 0.0
    %179 = vmatpush.msra.mxu0 0.0
    %180 = vmatpush.msra.mxu0 0.0
    %181 = vmatpush.msra.mxu0 0.0
    %182 = vmatpush.msra.mxu0 0.0
    %183 = vmatpush.msra.mxu0 0.0
    %184 = vmatpush.msra.mxu0 0.0
    %185 = vmatpush.msra.mxu0 %v144
    %186 = vmatpush.msra.mxu0 %v138
    %187 = vmatpush.msra.mxu0 %v132
    %188 = vmatpush.msra.mxu0 %v126
    %189 = vmatmul.f32.gmra.mxu0 %v168
    %v190 = vpop.f32.mrf.mxu0
    %v191 = vadd.f32 %v154, %v190
    %192 = vmatmul.f32.gmra.mxu0 %v171
    %v193 = vpop.f32.mrf.mxu0
    %v194 = vadd.f32 %v154, %v193
    %195 = vdwg.mxu0
    %196 = vmatpush.msra.mxu0 0.0
    %197 = vmatpush.msra.mxu0 0.0
    %198 = vmatpush.msra.mxu0 0.0
    %199 = vmatpush.msra.mxu0 0.0
    %200 = vmatpush.msra.mxu0 0.0
    %201 = vmatpush.msra.mxu0 0.0
    %202 = vmatpush.msra.mxu0 0.0
    %203 = vmatpush.msra.mxu0 0.0
    %204 = vmatpush.msra.mxu0 0.0
    %205 = vmatpush.msra.mxu0 0.0
    %206 = vmatpush.msra.mxu0 0.0
    %207 = vmatpush.msra.mxu0 0.0
    %208 = vmatpush.msra.mxu0 %v145
    %209 = vmatpush.msra.mxu0 %v139
    %210 = vmatpush.msra.mxu0 %v133
    %211 = vmatpush.msra.mxu0 %v127
    %212 = vmatmul.f32.gmra.mxu0 %v168
    %v213 = vpop.f32.mrf.mxu0
    %v214 = vadd.f32 %v155, %v213
    %215 = vmatmul.f32.gmra.mxu0 %v171
    %v216 = vpop.f32.mrf.mxu0
    %v217 = vadd.f32 %v155, %v216
    %218 = vdwg.mxu0
    %219 = vmatpush.msra.mxu0 0.0
    %220 = vmatpush.msra.mxu0 0.0
    %221 = vmatpush.msra.mxu0 0.0
    %222 = vmatpush.msra.mxu0 0.0
    %223 = vmatpush.msra.mxu0 0.0
    %224 = vmatpush.msra.mxu0 0.0
    %225 = vmatpush.msra.mxu0 0.0
    %226 = vmatpush.msra.mxu0 0.0
    %227 = vmatpush.msra.mxu0 0.0
    %228 = vmatpush.msra.mxu0 0.0
    %229 = vmatpush.msra.mxu0 0.0
    %230 = vmatpush.msra.mxu0 0.0
    %231 = vmatpush.msra.mxu0 %v146
    %232 = vmatpush.msra.mxu0 %v140
    %233 = vmatpush.msra.mxu0 %v134
    %234 = vmatpush.msra.mxu0 %v128
    %235 = vmatmul.f32.gmra.mxu0 %v168
    %v236 = vpop.f32.mrf.mxu0
    %v237 = vadd.f32 %v156, %v236
    %238 = vmatmul.f32.gmra.mxu0 %v171
    %v239 = vpop.f32.mrf.mxu0
    %v240 = vadd.f32 %v156, %v239
    %241 = vdwg.mxu0
    %242 = vmatpush.msra.mxu0 0.0
    %243 = vmatpush.msra.mxu0 0.0
    %244 = vmatpush.msra.mxu0 0.0
    %245 = vmatpush.msra.mxu0 0.0
    %246 = vmatpush.msra.mxu0 0.0
    %247 = vmatpush.msra.mxu0 0.0
    %248 = vmatpush.msra.mxu0 0.0
    %249 = vmatpush.msra.mxu0 0.0
    %250 = vmatpush.msra.mxu0 0.0
    %251 = vmatpush.msra.mxu0 0.0
    %252 = vmatpush.msra.mxu0 0.0
    %253 = vmatpush.msra.mxu0 0.0
    %254 = vmatpush.msra.mxu0 %v147
    %255 = vmatpush.msra.mxu0 %v141
    %256 = vmatpush.msra.mxu0 %v135
    %257 = vmatpush.msra.mxu0 %v129
    %258 = vmatmul.f32.gmra.mxu0 %v168
    %v259 = vpop.f32.mrf.mxu0
    %v260 = vadd.f32 %v157, %v259
    %261 = vmatmul.f32.gmra.mxu0 %v171
    %v262 = vpop.f32.mrf.mxu0
    %v263 = vadd.f32 %v157, %v262
    %264 = vdwg.mxu0
    %265 = vmatpush.msra.mxu0 0.0
    %266 = vmatpush.msra.mxu0 0.0
    %267 = vmatpush.msra.mxu0 0.0
    %268 = vmatpush.msra.mxu0 0.0
    %269 = vmatpush.msra.mxu0 0.0
    %270 = vmatpush.msra.mxu0 0.0
    %271 = vmatpush.msra.mxu0 0.0
    %272 = vmatpush.msra.mxu0 0.0
    %273 = vmatpush.msra.mxu0 0.0
    %274 = vmatpush.msra.mxu0 0.0
    %275 = vmatpush.msra.mxu0 0.0
    %276 = vmatpush.msra.mxu0 0.0
    %277 = vmatpush.msra.mxu0 %v148
    %278 = vmatpush.msra.mxu0 %v142
    %279 = vmatpush.msra.mxu0 %v136
    %280 = vmatpush.msra.mxu0 %v130
    %281 = vmatmul.f32.gmra.mxu0 %v168
    %v282 = vpop.f32.mrf.mxu0
    %v283 = vadd.f32 %v158, %v282
    %284 = vmatmul.f32.gmra.mxu0 %v171
    %v285 = vpop.f32.mrf.mxu0
    %v286 = vadd.f32 %v158, %v285
    %287 = vdwg.mxu0
    %288 = vmatpush.msra.mxu0 0.0
    %289 = vmatpush.msra.mxu0 0.0
    %290 = vmatpush.msra.mxu0 0.0
    %291 = vmatpush.msra.mxu0 0.0
    %292 = vmatpush.msra.mxu0 0.0
    %293 = vmatpush.msra.mxu0 0.0
    %294 = vmatpush.msra.mxu0 0.0
    %295 = vmatpush.msra.mxu0 0.0
    %296 = vmatpush.msra.mxu0 0.0
    %297 = vmatpush.msra.mxu0 0.0
    %298 = vmatpush.msra.mxu0 0.0
    %299 = vmatpush.msra.mxu0 0.0
    %300 = vmatpush.msra.mxu0 %v149
    %301 = vmatpush.msra.mxu0 %v143
    %302 = vmatpush.msra.mxu0 %v137
    %303 = vmatpush.msra.mxu0 %v131
    %304 = vmatmul.f32.gmra.mxu0 %v168
    %v305 = vpop.f32.mrf.mxu0
    %v306 = vadd.f32 %v159, %v305
    %307 = vmatmul.f32.gmra.mxu0 %v171
    %v308 = vpop.f32.mrf.mxu0
    %v309 = vadd.f32 %v159, %v308
    %310 = vdwg.mxu0
    %v311 = vld [vmem:[#allocation2 + $0x100] sm:$0xff]
    %v312 = vld [vmem:[#allocation2 + $0x108] sm:$0xff]
    %v313 = vld [vmem:[#allocation2 + $0x110] sm:$0xff]
    %v314 = vld [vmem:[#allocation2 + $0x118] sm:$0xff]
    %v315 = vld [vmem:[#allocation2 + $0x120] sm:$0xff]
    %v316 = vld [vmem:[#allocation2 + $0x128] sm:$0xff]
    %v317 = vld [vmem:[#allocation2 + $0x130] sm:$0xff]
    %v318 = vld [vmem:[#allocation2 + $0x138] sm:$0xff]
    %v319 = vld [vmem:[#allocation2 + $0x140] sm:$0xff]
    %v320 = vld [vmem:[#allocation2 + $0x148] sm:$0xff]
    %v321 = vld [vmem:[#allocation2 + $0x150] sm:$0xff]
    %v322 = vld [vmem:[#allocation2 + $0x158] sm:$0xff]
    %v323 = vld [vmem:[#allocation2 + $0x160] sm:$0xff]
    %v324 = vld [vmem:[#allocation2 + $0x168] sm:$0xff]
    %v325 = vld [vmem:[#allocation2 + $0x170] sm:$0xff]
    %v326 = vld [vmem:[#allocation2 + $0x178] sm:$0xff]
    %v327 = vld [vmem:[#allocation2 + $0x180] sm:$0xff]
    %v328 = vld [vmem:[#allocation2 + $0x188] sm:$0xff]
    %v329 = vld [vmem:[#allocation2 + $0x190] sm:$0xff]
    %v330 = vld [vmem:[#allocation2 + $0x198] sm:$0xff]
    %v331 = vld [vmem:[#allocation2 + $0x1a0] sm:$0xff]
    %v332 = vld [vmem:[#allocation2 + $0x1a8] sm:$0xff]
    %v333 = vld [vmem:[#allocation2 + $0x1b0] sm:$0xff]
    %v334 = vld [vmem:[#allocation2 + $0x1b8] sm:$0xff]
    %v335 = vld [vmem:[#allocation2 + $0x1c0] sm:$0xff]
    %v336 = vld [vmem:[#allocation2 + $0x1c8] sm:$0xff]
    %v337 = vld [vmem:[#allocation2 + $0x1d0] sm:$0xff]
    %v338 = vld [vmem:[#allocation2 + $0x1d8] sm:$0xff]
    %v339 = vld [vmem:[#allocation2 + $0x1e0] sm:$0xff]
    %v340 = vld [vmem:[#allocation2 + $0x1e8] sm:$0xff]
    %v341 = vld [vmem:[#allocation2 + $0x1f0] sm:$0xff]
    %v342 = vld [vmem:[#allocation2 + $0x1f8] sm:$0xff]
    %v343 = vld [vmem:[%s3 + $0x1] ss:$0 sm:$0xff]
    %344 = vmatpush.xpose.msra.mxu0 0.0
    %345 = vmatpush.xpose.msra.mxu0 0.0
    %346 = vmatpush.xpose.msra.mxu0 0.0
    %347 = vmatpush.xpose.msra.mxu0 0.0
    %348 = vmatpush.xpose.msra.mxu0 0.0
    %349 = vmatpush.xpose.msra.mxu0 0.0
    %350 = vmatpush.xpose.msra.mxu0 0.0
    %351 = vmatpush.xpose.msra.mxu0 0.0
    %352 = vmatpush.xpose.msra.mxu0 0.0
    %353 = vmatpush.xpose.msra.mxu0 0.0
    %354 = vmatpush.xpose.msra.mxu0 0.0
    %355 = vmatpush.xpose.msra.mxu0 0.0
    %356 = vmatpush.xpose.msra.mxu0 0.0
    %357 = vmatpush.xpose.msra.mxu0 0.0
    %358 = vmatpush.xpose.msra.mxu0 0.0
    %359 = vmatpush.xpose.msra.mxu0 %v237
    %360 = vmatmul.f32.gmra.mxu0 %v191
    %v361 = vpop.f32.mrf.mxu0
    %v362 = vadd.f32 0.0, %v361
    %363 = vdwg.mxu0
    %vm364 = vcmask 36864
    %v365 = vsel %vm364, %v362, -inf
    %366 = vmax.xlane.f32.xlu0 %v365
    %v367 = vpop.xlane.xlu0 %366
    %v368 = vsub.f32 %v362, %v367
    %v369 = vmul.f32 %v368, 1.442695
    %v370 = vpow.pop %v369
    %v371 = vsel %vm364, %v370, 0.0
    %372 = vadd.xlane.f32.xlu0 %v371
    %v373 = vpop.xlane.xlu0 %372
    %v374 = vrcp.pop %v373
    %v375 = vmul.f32 %v370, %v374
    %vm376 = vcmask 39936
    %v378 = vsel %vm376, %v375, 0
    %vm380 = vcmask 1044480
    %v382 = vsel %vm380, %v283, 0
    %384 = vmatpush.msra.mxu0 0.0
    %385 = vmatpush.msra.mxu0 0.0
    %386 = vmatpush.msra.mxu0 0.0
    %387 = vmatpush.msra.mxu0 0.0
    %388 = vmatpush.msra.mxu0 0.0
    %389 = vmatpush.msra.mxu0 0.0
    %390 = vmatpush.msra.mxu0 0.0
    %391 = vmatpush.msra.mxu0 0.0
    %392 = vmatpush.msra.mxu0 0.0
    %393 = vmatpush.msra.mxu0 0.0
    %394 = vmatpush.msra.mxu0 0.0
    %395 = vmatpush.msra.mxu0 0.0
    %396 = vmatpush.msra.mxu0 0.0
    %397 = vmatpush.msra.mxu0 0.0
    %398 = vmatpush.msra.mxu0 0.0
    %399 = vmatpush.msra.mxu0 %v382
    %400 = vmatmul.f32.gmra.mxu0 %v378
    %v401 = vpop.f32.mrf.mxu0
    %v402 = vadd.f32 0.0, %v401
    %403 = vdwg.mxu0
    %404 = vmatpush.xpose.msra.mxu0 0.0
    %405 = vmatpush.xpose.msra.mxu0 0.0
    %406 = vmatpush.xpose.msra.mxu0 0.0
    %407 = vmatpush.xpose.msra.mxu0 0.0
    %408 = vmatpush.xpose.msra.mxu0 0.0
    %409 = vmatpush.xpose.msra.mxu0 0.0
    %410 = vmatpush.xpose.msra.mxu0 0.0
    %411 = vmatpush.xpose.msra.mxu0 0.0
    %412 = vmatpush.xpose.msra.mxu0 0.0
    %413 = vmatpush.xpose.msra.mxu0 0.0
    %414 = vmatpush.xpose.msra.mxu0 0.0
    %415 = vmatpush.xpose.msra.mxu0 0.0
    %416 = vmatpush.xpose.msra.mxu0 0.0
    %417 = vmatpush.xpose.msra.mxu0 0.0
    %418 = vmatpush.xpose.msra.mxu0 0.0
    %419 = vmatpush.xpose.msra.mxu0 %v260
    %420 = vmatmul.f32.gmra.mxu0 %v214
    %v421 = vpop.f32.mrf.mxu0
    %v422 = vadd.f32 0.0, %v421
    %423 = vdwg.mxu0
    %v424 = vsel %vm364, %v422, -inf
    %425 = vmax.xlane.f32.xlu0 %v424
    %v426 = vpop.xlane.xlu0 %425
    %v427 = vsub.f32 %v422, %v426
    %v428 = vmul.f32 %v427, 1.442695
    %v429 = vpow.pop %v428
    %v430 = vsel %vm364, %v429, 0.0
    %431 = vadd.xlane.f32.xlu0 %v430
    %v432 = vpop.xlane.xlu0 %431
    %v433 = vrcp.pop %v432
    %v434 = vmul.f32 %v429, %v433
    %v436 = vsel %vm376, %v434, 0
    %v439 = vsel %vm380, %v306, 0
    %441 = vmatpush.msra.mxu0 0.0
    %442 = vmatpush.msra.mxu0 0.0
    %443 = vmatpush.msra.mxu0 0.0
    %444 = vmatpush.msra.mxu0 0.0
    %445 = vmatpush.msra.mxu0 0.0
    %446 = vmatpush.msra.mxu0 0.0
    %447 = vmatpush.msra.mxu0 0.0
    %448 = vmatpush.msra.mxu0 0.0
    %449 = vmatpush.msra.mxu0 0.0
    %450 = vmatpush.msra.mxu0 0.0
    %451 = vmatpush.msra.mxu0 0.0
    %452 = vmatpush.msra.mxu0 0.0
    %453 = vmatpush.msra.mxu0 0.0
    %454 = vmatpush.msra.mxu0 0.0
    %455 = vmatpush.msra.mxu0 0.0
    %456 = vmatpush.msra.mxu0 %v439
    %457 = vmatmul.f32.gmra.mxu0 %v436
    %v458 = vpop.f32.mrf.mxu0
    %v459 = vadd.f32 0.0, %v458
    %460 = vdwg.mxu0
    %vm463 = vcmask 1042432
    %v464 = vrot.slane %v191, 5
    %v465 = vrot.slane %v194, 5
    %v466 = vsel %vm463, %v464, %v465
    %v470 = vrot.slane %v237, 5
    %v471 = vrot.slane %v240, 5
    %v472 = vsel %vm463, %v470, %v471
    %474 = vmatpush.xpose.msra.mxu0 0.0
    %475 = vmatpush.xpose.msra.mxu0 0.0
    %476 = vmatpush.xpose.msra.mxu0 0.0
    %477 = vmatpush.xpose.msra.mxu0 0.0
    %478 = vmatpush.xpose.msra.mxu0 0.0
    %479 = vmatpush.xpose.msra.mxu0 0.0
    %480 = vmatpush.xpose.msra.mxu0 0.0
    %481 = vmatpush.xpose.msra.mxu0 0.0
    %482 = vmatpush.xpose.msra.mxu0 0.0
    %483 = vmatpush.xpose.msra.mxu0 0.0
    %484 = vmatpush.xpose.msra.mxu0 0.0
    %485 = vmatpush.xpose.msra.mxu0 0.0
    %486 = vmatpush.xpose.msra.mxu0 0.0
    %487 = vmatpush.xpose.msra.mxu0 0.0
    %488 = vmatpush.xpose.msra.mxu0 0.0
    %489 = vmatpush.xpose.msra.mxu0 %v472
    %490 = vmatmul.f32.gmra.mxu0 %v466
    %v491 = vpop.f32.mrf.mxu0
    %v492 = vadd.f32 0.0, %v491
    %493 = vdwg.mxu0
    %v494 = vsel %vm364, %v492, -inf
    %495 = vmax.xlane.f32.xlu0 %v494
    %v496 = vpop.xlane.xlu0 %495
    %v497 = vsub.f32 %v492, %v496
    %v498 = vmul.f32 %v497, 1.442695
    %v499 = vpow.pop %v498
    %v500 = vsel %vm364, %v499, 0.0
    %501 = vadd.xlane.f32.xlu0 %v500
    %v502 = vpop.xlane.xlu0 %501
    %v503 = vrcp.pop %v502
    %v504 = vmul.f32 %v499, %v503
    %v506 = vrot.slane %v283, 5
    %v507 = vrot.slane %v286, 5
    %v508 = vsel %vm463, %v506, %v507
    %v510 = vsel %vm376, %v504, 0
    %v512 = vsel %vm380, %v508, 0
    %514 = vmatpush.msra.mxu0 0.0
    %515 = vmatpush.msra.mxu0 0.0
    %516 = vmatpush.msra.mxu0 0.0
    %517 = vmatpush.msra.mxu0 0.0
    %518 = vmatpush.msra.mxu0 0.0
    %519 = vmatpush.msra.mxu0 0.0
    %520 = vmatpush.msra.mxu0 0.0
    %521 = vmatpush.msra.mxu0 0.0
    %522 = vmatpush.msra.mxu0 0.0
    %523 = vmatpush.msra.mxu0 0.0
    %524 = vmatpush.msra.mxu0 0.0
    %525 = vmatpush.msra.mxu0 0.0
    %526 = vmatpush.msra.mxu0 0.0
    %527 = vmatpush.msra.mxu0 0.0
    %528 = vmatpush.msra.mxu0 0.0
    %529 = vmatpush.msra.mxu0 %v512
    %530 = vmatmul.f32.gmra.mxu0 %v510
    %v531 = vpop.f32.mrf.mxu0
    %v532 = vadd.f32 0.0, %v531
    %533 = vdwg.mxu0
    %v536 = vrot.slane %v214, 5
    %v537 = vrot.slane %v217, 5
    %v538 = vsel %vm463, %v536, %v537
    %v542 = vrot.slane %v260, 5
    %v543 = vrot.slane %v263, 5
    %v544 = vsel %vm463, %v542, %v543
    %546 = vmatpush.xpose.msra.mxu0 0.0
    %547 = vmatpush.xpose.msra.mxu0 0.0
    %548 = vmatpush.xpose.msra.mxu0 0.0
    %549 = vmatpush.xpose.msra.mxu0 0.0
    %550 = vmatpush.xpose.msra.mxu0 0.0
    %551 = vmatpush.xpose.msra.mxu0 0.0
    %552 = vmatpush.xpose.msra.mxu0 0.0
    %553 = vmatpush.xpose.msra.mxu0 0.0
    %554 = vmatpush.xpose.msra.mxu0 0.0
    %555 = vmatpush.xpose.msra.mxu0 0.0
    %556 = vmatpush.xpose.msra.mxu0 0.0
    %557 = vmatpush.xpose.msra.mxu0 0.0
    %558 = vmatpush.xpose.msra.mxu0 0.0
    %559 = vmatpush.xpose.msra.mxu0 0.0
    %560 = vmatpush.xpose.msra.mxu0 0.0
    %561 = vmatpush.xpose.msra.mxu0 %v544
    %562 = vmatmul.f32.gmra.mxu0 %v538
    %v563 = vpop.f32.mrf.mxu0
    %v564 = vadd.f32 0.0, %v563
    %565 = vdwg.mxu0
    %v566 = vsel %vm364, %v564, -inf
    %567 = vmax.xlane.f32.xlu0 %v566
    %v568 = vpop.xlane.xlu0 %567
    %v569 = vsub.f32 %v564, %v568
    %v570 = vmul.f32 %v569, 1.442695
    %v571 = vpow.pop %v570
    %v572 = vsel %vm364, %v571, 0.0
    %573 = vadd.xlane.f32.xlu0 %v572
    %v574 = vpop.xlane.xlu0 %573
    %v575 = vrcp.pop %v574
    %v576 = vmul.f32 %v571, %v575
    %v578 = vrot.slane %v306, 5
    %v579 = vrot.slane %v309, 5
    %v580 = vsel %vm463, %v578, %v579
    %v582 = vsel %vm376, %v576, 0
    %v584 = vsel %vm380, %v580, 0
    %586 = vmatpush.msra.mxu0 0.0
    %587 = vmatpush.msra.mxu0 0.0
    %588 = vmatpush.msra.mxu0 0.0
    %589 = vmatpush.msra.mxu0 0.0
    %590 = vmatpush.msra.mxu0 0.0
    %591 = vmatpush.msra.mxu0 0.0
    %592 = vmatpush.msra.mxu0 0.0
    %593 = vmatpush.msra.mxu0 0.0
    %594 = vmatpush.msra.mxu0 0.0
    %595 = vmatpush.msra.mxu0 0.0
    %596 = vmatpush.msra.mxu0 0.0
    %597 = vmatpush.msra.mxu0 0.0
    %598 = vmatpush.msra.mxu0 0.0
    %599 = vmatpush.msra.mxu0 0.0
    %600 = vmatpush.msra.mxu0 0.0
    %601 = vmatpush.msra.mxu0 %v584
    %602 = vmatmul.f32.gmra.mxu0 %v582
    %v603 = vpop.f32.mrf.mxu0
    %v604 = vadd.f32 0.0, %v603
    %605 = vdwg.mxu0
    %v608 = vrot.slane %v532, 3
    %v609 = vrot.slane %v604, 3
    %v612 = vsel %vm380, %v402, %v608
    %v613 = vsel %vm380, %v459, %v609
    %614 = vmatpush.msra.mxu0 %v326
    %615 = vmatpush.msra.mxu0 %v325
    %616 = vmatpush.msra.mxu0 %v324
    %617 = vmatpush.msra.mxu0 %v323
    %618 = vmatpush.msra.mxu0 %v322
    %619 = vmatpush.msra.mxu0 %v321
    %620 = vmatpush.msra.mxu0 %v320
    %621 = vmatpush.msra.mxu0 %v319
    %622 = vmatpush.msra.mxu0 %v318
    %623 = vmatpush.msra.mxu0 %v317
    %624 = vmatpush.msra.mxu0 %v316
    %625 = vmatpush.msra.mxu0 %v315
    %626 = vmatpush.msra.mxu0 %v314
    %627 = vmatpush.msra.mxu0 %v313
    %628 = vmatpush.msra.mxu0 %v312
    %629 = vmatpush.msra.mxu0 %v311
    %630 = vmatmul.f32.gmra.mxu0 %v612
    %v631 = vpop.f32.mrf.mxu0
    %v632 = vadd.f32 %v343, %v631
    %633 = vmatmul.f32.gmra.mxu0 %v608
    %v634 = vpop.f32.mrf.mxu0
    %v635 = vadd.f32 %v343, %v634
    %636 = vdwg.mxu0
    %637 = vmatpush.msra.mxu0 %v342
    %638 = vmatpush.msra.mxu0 %v341
    %639 = vmatpush.msra.mxu0 %v340
    %640 = vmatpush.msra.mxu0 %v339
    %641 = vmatpush.msra.mxu0 %v338
    %642 = vmatpush.msra.mxu0 %v337
    %643 = vmatpush.msra.mxu0 %v336
    %644 = vmatpush.msra.mxu0 %v335
    %645 = vmatpush.msra.mxu0 %v334
    %646 = vmatpush.msra.mxu0 %v333
    %647 = vmatpush.msra.mxu0 %v332
    %648 = vmatpush.msra.mxu0 %v331
    %649 = vmatpush.msra.mxu0 %v330
    %650 = vmatpush.msra.mxu0 %v329
    %651 = vmatpush.msra.mxu0 %v328
    %652 = vmatpush.msra.mxu0 %v327
    %653 = vmatmul.f32.gmra.mxu0 %v613
    %v654 = vpop.f32.mrf.mxu0
    %v655 = vadd.f32 %v632, %v654
    %656 = vmatmul.f32.gmra.mxu0 %v609
    %v657 = vpop.f32.mrf.mxu0
    %v658 = vadd.f32 %v635, %v657
    %659 = vdwg.mxu0
    %v660 = vadd.f32 %v121, %v655
    %v661 = vadd.f32 %v124, %v658
    %v662 = vld [vmem:[%s3 + $0x2] ss:$0 sm:$0xff]
    %v663 = vld [vmem:[%s3 + $0x3] ss:$0 sm:$0xff]
    %v664 = vsel %vm166, %v660, 0.0
    %665 = vadd.xlane.f32.xlu0 %v664
    %v666 = vpop.xlane.xlu0 %665
    %vm667 = vcmask 254976
    %v668 = vsel %vm667, %v661, 0.0
    %669 = vadd.xlane.f32.xlu0 %v668
    %v670 = vpop.xlane.xlu0 %669
    %v671 = vrcp.pop 32.0
    %v672 = vmul.f32 32.0, %v671
    %v673 = vsub.f32 1.0, %v672
    %v674 = vmul.f32 %v671, %v673
    %v675 = vadd.f32 %v671, %v674
    %vm676 = vweird.f32 %v671
    %v677 = vsel %vm676, %v671, %v675
    %v678 = vmul.f32 %v666, %v677
    %v679 = vmul.f32 %v670, %v677
    %v680 = vsub.f32 %v660, %v678
    %v681 = vsub.f32 %v661, %v679
    %v682 = vmul.f32 %v680, %v680
    %v683 = vmul.f32 %v681, %v681
    %v684 = vsel %vm166, %v682, 0.0
    %685 = vadd.xlane.f32.xlu0 %v684
    %v686 = vpop.xlane.xlu0 %685
    %v687 = vsel %vm667, %v683, 0.0
    %688 = vadd.xlane.f32.xlu0 %v687
    %v689 = vpop.xlane.xlu0 %688
    %v690 = vmul.f32 %v686, %v677
    %v691 = vmul.f32 %v689, %v677
    %v692 = vadd.f32 %v690, 1e-05
    %v693 = vadd.f32 %v691, 1e-05
    %v694 = vrsqrt.pop %v692
    %v695 = vmul.f32 %v694, %v692
    %v696 = vmul.f32 %v695, %v694
    %v697 = vmul.f32 0.5, %v696
    %v698 = vsub.f32 1.5, %v697
    %v699 = vmul.f32 %v694, %v698
    %vm700 = vweird.f32 %v692
    %vm701 = vweird.f32 %v694
    %vm702 = vmor %vm700, %vm701
    %v703 = vsel %vm702, %v694, %v699
    %v704 = vrsqrt.pop %v693
    %v705 = vmul.f32 %v704, %v693
    %v706 = vmul.f32 %v705, %v704
    %v707 = vmul.f32 0.5, %v706
    %v708 = vsub.f32 1.5, %v707
    %v709 = vmul.f32 %v704, %v708
    %vm710 = vweird.f32 %v693
    %vm711 = vweird.f32 %v704
    %vm712 = vmor %vm710, %vm711
    %v713 = vsel %vm712, %v704, %v709
    %v714 = vmul.f32 %v680, %v703
    %v715 = vmul.f32 %v681, %v713
    %v716 = vmul.f32 %v714, %v662
    %v717 = vmul.f32 %v715, %v662
    %v718 = vadd.f32 %v716, %v663
    %v719 = vadd.f32 %v717, %v663
    %v720 = vld [vmem:[%s1 + $0x30] sm:$0xff]
    %v721 = vld [vmem:[%s1 + $0xa0] sm:$0xff]
    %v722 = vld [vmem:[%s1 + $0x110] sm:$0xff]
    %v723 = vld [vmem:[%s1 + $0x180] sm:$0xff]
    %v724 = vld [vmem:[%s3 + $0x4] ss:$0 sm:$0xff]
    %v726 = vsel %vm166, %v718, 0
    %v729 = vsel %vm166, %v719, 0
    %731 = vmatpush.msra.mxu0 0.0
    %732 = vmatpush.msra.mxu0 0.0
    %733 = vmatpush.msra.mxu0 0.0
    %734 = vmatpush.msra.mxu0 0.0
    %735 = vmatpush.msra.mxu0 0.0
    %736 = vmatpush.msra.mxu0 0.0
    %737 = vmatpush.msra.mxu0 0.0
    %738 = vmatpush.msra.mxu0 0.0
    %739 = vmatpush.msra.mxu0 0.0
    %740 = vmatpush.msra.mxu0 0.0
    %741 = vmatpush.msra.mxu0 0.0
    %742 = vmatpush.msra.mxu0 0.0
    %743 = vmatpush.msra.mxu0 %v723
    %744 = vmatpush.msra.mxu0 %v722
    %745 = vmatpush.msra.mxu0 %v721
    %746 = vmatpush.msra.mxu0 %v720
    %747 = vmatmul.f32.gmra.mxu0 %v726
    %v748 = vpop.f32.mrf.mxu0
    %v749 = vadd.f32 %v724, %v748
    %750 = vmatmul.f32.gmra.mxu0 %v729
    %v751 = vpop.f32.mrf.mxu0
    %v752 = vadd.f32 %v724, %v751
    %753 = vdwg.mxu0
    %v754 = vmul.f32 %v749, %v749
    %v755 = vmul.f32 %v752, %v752
    %v756 = vmul.f32 %v749, %v754
    %v757 = vmul.f32 %v752, %v755
    %v758 = vmul.f32 %v756, 0.044715
    %v759 = vmul.f32 %v757, 0.044715
    %v760 = vadd.f32 %v749, %v758
    %v761 = vadd.f32 %v752, %v759
    %v762 = vmul.f32 %v760, 0.7978846
    %v763 = vmul.f32 %v761, 0.7978846
    %v764 = vtanh.pop %v762
    %v765 = vtanh.pop %v763
    %v766 = vadd.f32 %v764, 1.0
    %v767 = vadd.f32 %v765, 1.0
    %v768 = vmul.f32 %v766, 0.5
    %v769 = vmul.f32 %v767, 0.5
    %v770 = vmul.f32 %v749, %v768
    %v771 = vmul.f32 %v752, %v769
    %v772 = vld [vmem:[#allocation2 + $0x200] sm:$0xff]
    %v773 = vld [vmem:[#allocation2 + $0x208] sm:$0xff]
    %v774 = vld [vmem:[#allocation2 + $0x210] sm:$0xff]
    %v775 = vld [vmem:[#allocation2 + $0x218] sm:$0xff]
    %v776 = vld [vmem:[#allocation2 + $0x220] sm:$0xff]
    %v777 = vld [vmem:[#allocation2 + $0x228] sm:$0xff]
    %v778 = vld [vmem:[#allocation2 + $0x230] sm:$0xff]
    %v779 = vld [vmem:[#allocation2 + $0x238] sm:$0xff]
    %v780 = vld [vmem:[#allocation2 + $0x240] sm:$0xff]
    %v781 = vld [vmem:[#allocation2 + $0x248] sm:$0xff]
    %v782 = vld [vmem:[#allocation2 + $0x250] sm:$0xff]
    %v783 = vld [vmem:[#allocation2 + $0x258] sm:$0xff]
    %v784 = vld [vmem:[#allocation2 + $0x260] sm:$0xff]
    %v785 = vld [vmem:[#allocation2 + $0x268] sm:$0xff]
    %v786 = vld [vmem:[#allocation2 + $0x270] sm:$0xff]
    %v787 = vld [vmem:[#allocation2 + $0x278] sm:$0xff]
    %v788 = vld [vmem:[%s3 + $0x5] ss:$0 sm:$0xff]
    %789 = vmatpush.msra.mxu0 %v787
    %790 = vmatpush.msra.mxu0 %v786
    %791 = vmatpush.msra.mxu0 %v785
    %792 = vmatpush.msra.mxu0 %v784
    %793 = vmatpush.msra.mxu0 %v783
    %794 = vmatpush.msra.mxu0 %v782
    %795 = vmatpush.msra.mxu0 %v781
    %796 = vmatpush.msra.mxu0 %v780
    %797 = vmatpush.msra.mxu0 %v779
    %798 = vmatpush.msra.mxu0 %v778
    %799 = vmatpush.msra.mxu0 %v777
    %800 = vmatpush.msra.mxu0 %v776
    %801 = vmatpush.msra.mxu0 %v775
    %802 = vmatpush.msra.mxu0 %v774
    %803 = vmatpush.msra.mxu0 %v773
    %804 = vmatpush.msra.mxu0 %v772
    %805 = vmatmul.f32.gmra.mxu0 %v770
    %v806 = vpop.f32.mrf.mxu0
    %v807 = vadd.f32 %v788, %v806
    %808 = vmatmul.f32.gmra.mxu0 %v771
    %v809 = vpop.f32.mrf.mxu0
    %v810 = vadd.f32 %v788, %v809
    %811 = vdwg.mxu0
    %v812 = vadd.f32 %v718, %v807
    %v813 = vadd.f32 %v719, %v810
    %v814 = vld [vmem:[%s3 + $0x6] ss:$0 sm:$0xff]
    %v815 = vld [vmem:[%s3 + $0x7] ss:$0 sm:$0xff]
    %v816 = vsel %vm166, %v812, 0.0
    %817 = vadd.xlane.f32.xlu0 %v816
    %v818 = vpop.xlane.xlu0 %817
    %v819 = vsel %vm667, %v813, 0.0
    %820 = vadd.xlane.f32.xlu0 %v819
    %v821 = vpop.xlane.xlu0 %820
    %v822 = vmul.f32 %v818, %v677
    %v823 = vmul.f32 %v821, %v677
    %v824 = vsub.f32 %v812, %v822
    %v825 = vsub.f32 %v813, %v823
    %v826 = vmul.f32 %v824, %v824
    %v827 = vmul.f32 %v825, %v825
    %v828 = vsel %vm166, %v826, 0.0
    %829 = vadd.xlane.f32.xlu0 %v828
    %v830 = vpop.xlane.xlu0 %829
    %v831 = vsel %vm667, %v827, 0.0
    %832 = vadd.xlane.f32.xlu0 %v831
    %v833 = vpop.xlane.xlu0 %832
    %v834 = vmul.f32 %v830, %v677
    %v835 = vmul.f32 %v833, %v677
    %v836 = vadd.f32 %v834, 1e-05
    %v837 = vadd.f32 %v835, 1e-05
    %v838 = vrsqrt.pop %v836
    %v839 = vmul.f32 %v838, %v836
    %v840 = vmul.f32 %v839, %v838
    %v841 = vmul.f32 0.5, %v840
    %v842 = vsub.f32 1.5, %v841
    %v843 = vmul.f32 %v838, %v842
    %vm844 = vweird.f32 %v836
    %vm845 = vweird.f32 %v838
    %vm846 = vmor %vm844, %vm845
    %v847 = vsel %vm846, %v838, %v843
    %v848 = vrsqrt.pop %v837
    %v849 = vmul.f32 %v848, %v837
    %v850 = vmul.f32 %v849, %v848
    %v851 = vmul.f32 0.5, %v850
    %v852 = vsub.f32 1.5, %v851
    %v853 = vmul.f32 %v848, %v852
    %vm854 = vweird.f32 %v837
    %vm855 = vweird.f32 %v848
    %vm856 = vmor %vm854, %vm855
    %v857 = vsel %vm856, %v848, %v853
    %v858 = vmul.f32 %v824, %v847
    %v859 = vmul.f32 %v825, %v857
    %v860 = vmul.f32 %v858, %v814
    %v861 = vmul.f32 %v859, %v814
    %v862 = vadd.f32 %v860, %v815
    %v863 = vadd.f32 %v861, %v815
    %v864 = vld [vmem:[%s3 + $0x30] ss:$0 sm:$0xff]
    %v865 = vld [vmem:[%s3 + $0x31] ss:$0 sm:$0xff]
    %v866 = vsel %vm166, %v862, 0.0
    %867 = vadd.xlane.f32.xlu0 %v866
    %v868 = vpop.xlane.xlu0 %867
    %v869 = vsel %vm667, %v863, 0.0
    %870 = vadd.xlane.f32.xlu0 %v869
    %v871 = vpop.xlane.xlu0 %870
    %v872 = vmul.f32 %v868, %v677
    %v873 = vmul.f32 %v871, %v677
    %v874 = vsub.f32 %v862, %v872
    %v875 = vsub.f32 %v863, %v873
    %v876 = vmul.f32 %v874, %v874
    %v877 = vmul.f32 %v875, %v875
    %v878 = vsel %vm166, %v876, 0.0
    %879 = vadd.xlane.f32.xlu0 %v878
    %v880 = vpop.xlane.xlu0 %879
    %v881 = vsel %vm667, %v877, 0.0
    %882 = vadd.xlane.f32.xlu0 %v881
    %v883 = vpop.xlane.xlu0 %882
    %v884 = vmul.f32 %v880, %v677
    %v885 = vmul.f32 %v883, %v677
    %v886 = vadd.f32 %v884, 1e-05
    %v887 = vadd.f32 %v885, 1e-05
    %v888 = vrsqrt.pop %v886
    %v889 = vmul.f32 %v888, %v886
    %v890 = vmul.f32 %v889, %v888
    %v891 = vmul.f32 0.5, %v890
    %v892 = vsub.f32 1.5, %v891
    %v893 = vmul.f32 %v888, %v892
    %vm894 = vweird.f32 %v886
    %vm895 = vweird.f32 %v888
    %vm896 = vmor %vm894, %vm895
    %v897 = vsel %vm896, %v888, %v893
    %v898 = vrsqrt.pop %v887
    %v899 = vmul.f32 %v898, %v887
    %v900 = vmul.f32 %v899, %v898
    %v901 = vmul.f32 0.5, %v900
    %v902 = vsub.f32 1.5, %v901
    %v903 = vmul.f32 %v898, %v902
    %vm904 = vweird.f32 %v887
    %vm905 = vweird.f32 %v898
    %vm906 = vmor %vm904, %vm905
    %v907 = vsel %vm906, %v898, %v903
    %v908 = vmul.f32 %v874, %v897
    %v909 = vmul.f32 %v875, %v907
    %v910 = vmul.f32 %v908, %v864
    %v911 = vmul.f32 %v909, %v864
    %v912 = vadd.f32 %v910, %v865
    %v913 = vadd.f32 %v911, %v865
    %v914 = vld [vmem:[%s1 + $0x38] sm:$0xff]
    %v915 = vld [vmem:[%s1 + $0x40] sm:$0xff]
    %v916 = vld [vmem:[%s1 + $0x48] sm:$0xff]
    %v917 = vld [vmem:[%s1 + $0x50] sm:$0xff]
    %v918 = vld [vmem:[%s1 + $0xa8] sm:$0xff]
    %v919 = vld [vmem:[%s1 + $0xb0] sm:$0xff]
    %v920 = vld [vmem:[%s1 + $0xb8] sm:$0xff]
    %v921 = vld [vmem:[%s1 + $0xc0] sm:$0xff]
    %v922 = vld [vmem:[%s1 + $0x118] sm:$0xff]
    %v923 = vld [vmem:[%s1 + $0x120] sm:$0xff]
    %v924 = vld [vmem:[%s1 + $0x128] sm:$0xff]
    %v925 = vld [vmem:[%s1 + $0x130] sm:$0xff]
    %v926 = vld [vmem:[%s1 + $0x188] sm:$0xff]
    %v927 = vld [vmem:[%s1 + $0x190] sm:$0xff]
    %v928 = vld [vmem:[%s1 + $0x198] sm:$0xff]
    %v929 = vld [vmem:[%s1 + $0x1a0] sm:$0xff]
    %s930 = scalar_lea.vmem %s3, 50
    %v931 = vld [vmem:[%s930] ss:$8 sm:$0xf]
    %v933 = vperm.slane %v931, 0
    %v934 = vperm.slane %v931, 1
    %v935 = vperm.slane %v931, 2
    %v936 = vperm.slane %v931, 3
    %v942 = vsel %vm166, %v912, 0
    %v945 = vsel %vm166, %v913, 0
    %947 = vmatpush.msra.mxu0 0.0
    %948 = vmatpush.msra.mxu0 0.0
    %949 = vmatpush.msra.mxu0 0.0
    %950 = vmatpush.msra.mxu0 0.0
    %951 = vmatpush.msra.mxu0 0.0
    %952 = vmatpush.msra.mxu0 0.0
    %953 = vmatpush.msra.mxu0 0.0
    %954 = vmatpush.msra.mxu0 0.0
    %955 = vmatpush.msra.mxu0 0.0
    %956 = vmatpush.msra.mxu0 0.0
    %957 = vmatpush.msra.mxu0 0.0
    %958 = vmatpush.msra.mxu0 0.0
    %959 = vmatpush.msra.mxu0 %v926
    %960 = vmatpush.msra.mxu0 %v922
    %961 = vmatpush.msra.mxu0 %v918
    %962 = vmatpush.msra.mxu0 %v914
    %963 = vmatmul.f32.gmra.mxu0 %v942
    %v964 = vpop.f32.mrf.mxu0
    %v965 = vadd.f32 %v933, %v964
    %966 = vmatmul.f32.gmra.mxu0 %v945
    %v967 = vpop.f32.mrf.mxu0
    %v968 = vadd.f32 %v933, %v967
    %969 = vdwg.mxu0
    %970 = vmatpush.msra.mxu0 0.0
    %971 = vmatpush.msra.mxu0 0.0
    %972 = vmatpush.msra.mxu0 0.0
    %973 = vmatpush.msra.mxu0 0.0
    %974 = vmatpush.msra.mxu0 0.0
    %975 = vmatpush.msra.mxu0 0.0
    %976 = vmatpush.msra.mxu0 0.0
    %977 = vmatpush.msra.mxu0 0.0
    %978 = vmatpush.msra.mxu0 0.0
    %979 = vmatpush.msra.mxu0 0.0
    %980 = vmatpush.msra.mxu0 0.0
    %981 = vmatpush.msra.mxu0 0.0
    %982 = vmatpush.msra.mxu0 %v927
    %983 = vmatpush.msra.mxu0 %v923
    %984 = vmatpush.msra.mxu0 %v919
    %985 = vmatpush.msra.mxu0 %v915
    %986 = vmatmul.f32.gmra.mxu0 %v942
    %v987 = vpop.f32.mrf.mxu0
    %v988 = vadd.f32 %v934, %v987
    %989 = vmatmul.f32.gmra.mxu0 %v945
    %v990 = vpop.f32.mrf.mxu0
    %v991 = vadd.f32 %v934, %v990
    %992 = vdwg.mxu0
    %993 = vmatpush.msra.mxu0 0.0
    %994 = vmatpush.msra.mxu0 0.0
    %995 = vmatpush.msra.mxu0 0.0
    %996 = vmatpush.msra.mxu0 0.0
    %997 = vmatpush.msra.mxu0 0.0
    %998 = vmatpush.msra.mxu0 0.0
    %999 = vmatpush.msra.mxu0 0.0
    %1000 = vmatpush.msra.mxu0 0.0
    %1001 = vmatpush.msra.mxu0 0.0
    %1002 = vmatpush.msra.mxu0 0.0
    %1003 = vmatpush.msra.mxu0 0.0
    %1004 = vmatpush.msra.mxu0 0.0
    %1005 = vmatpush.msra.mxu0 %v928
    %1006 = vmatpush.msra.mxu0 %v924
    %1007 = vmatpush.msra.mxu0 %v920
    %1008 = vmatpush.msra.mxu0 %v916
    %1009 = vmatmul.f32.gmra.mxu0 %v942
    %v1010 = vpop.f32.mrf.mxu0
    %v1011 = vadd.f32 %v935, %v1010
    %1012 = vmatmul.f32.gmra.mxu0 %v945
    %v1013 = vpop.f32.mrf.mxu0
    %v1014 = vadd.f32 %v935, %v1013
    %1015 = vdwg.mxu0
    %1016 = vmatpush.msra.mxu0 0.0
    %1017 = vmatpush.msra.mxu0 0.0
    %1018 = vmatpush.msra.mxu0 0.0
    %1019 = vmatpush.msra.mxu0 0.0
    %1020 = vmatpush.msra.mxu0 0.0
    %1021 = vmatpush.msra.mxu0 0.0
    %1022 = vmatpush.msra.mxu0 0.0
    %1023 = vmatpush.msra.mxu0 0.0
    %1024 = vmatpush.msra.mxu0 0.0
    %1025 = vmatpush.msra.mxu0 0.0
    %1026 = vmatpush.msra.mxu0 0.0
    %1027 = vmatpush.msra.mxu0 0.0
    %1028 = vmatpush.msra.mxu0 %v929
    %1029 = vmatpush.msra.mxu0 %v925
    %1030 = vmatpush.msra.mxu0 %v921
    %1031 = vmatpush.msra.mxu0 %v917
    %1032 = vmatmul.f32.gmra.mxu0 %v942
    %v1033 = vpop.f32.mrf.mxu0
    %v1034 = vadd.f32 %v936, %v1033
    %1035 = vmatmul.f32.gmra.mxu0 %v945
    %v1036 = vpop.f32.mrf.mxu0
    %v1037 = vadd.f32 %v936, %v1036
    %1038 = vdwg.mxu0
    %v1039 = vld [vmem:[%s3 + $0xf0] sm:$0xc0]
    %v1040 = vld [vmem:[%s3 + $0xf8] sm:$0xc0]
    %v1041 = vld [vmem:[%s3 + $0x120] sm:$0x3f]
    %v1042 = vld [vmem:[%s3 + $0x128] sm:$0x3f]
    %v1043 = vld [vmem:[%s3 + $0x90] sm:$0xc0]
    %v1044 = vld [vmem:[%s3 + $0xc0] sm:$0xff]
    %v1045 = vld [vmem:[%s3 + $0xf0] sm:$0x3f]
    %v1046 = vld [vmem:[#allocation2 + $0x280] sm:$0xff]
    %v1047 = vld [vmem:[#allocation2 + $0x288] sm:$0xff]
    %v1048 = vld [vmem:[#allocation2 + $0x290] sm:$0xff]
    %v1049 = vld [vmem:[#allocation2 + $0x298] sm:$0xff]
    %v1050 = vld [vmem:[#allocation2 + $0x2a0] sm:$0xff]
    %v1051 = vld [vmem:[#allocation2 + $0x2a8] sm:$0xff]
    %v1052 = vld [vmem:[#allocation2 + $0x2b0] sm:$0xff]
    %v1053 = vld [vmem:[#allocation2 + $0x2b8] sm:$0xff]
    %v1054 = vld [vmem:[#allocation2 + $0x2c0] sm:$0xff]
    %v1055 = vld [vmem:[#allocation2 + $0x2c8] sm:$0xff]
    %v1056 = vld [vmem:[#allocation2 + $0x2d0] sm:$0xff]
    %v1057 = vld [vmem:[#allocation2 + $0x2d8] sm:$0xff]
    %v1058 = vld [vmem:[#allocation2 + $0x2e0] sm:$0xff]
    %v1059 = vld [vmem:[#allocation2 + $0x2e8] sm:$0xff]
    %v1060 = vld [vmem:[#allocation2 + $0x2f0] sm:$0xff]
    %v1061 = vld [vmem:[#allocation2 + $0x2f8] sm:$0xff]
    %v1062 = vld [vmem:[#allocation2 + $0x300] sm:$0xff]
    %v1063 = vld [vmem:[#allocation2 + $0x308] sm:$0xff]
    %v1064 = vld [vmem:[#allocation2 + $0x310] sm:$0xff]
    %v1065 = vld [vmem:[#allocation2 + $0x318] sm:$0xff]
    %v1066 = vld [vmem:[#allocation2 + $0x320] sm:$0xff]
    %v1067 = vld [vmem:[#allocation2 + $0x328] sm:$0xff]
    %v1068 = vld [vmem:[#allocation2 + $0x330] sm:$0xff]
    %v1069 = vld [vmem:[#allocation2 + $0x338] sm:$0xff]
    %v1070 = vld [vmem:[#allocation2 + $0x340] sm:$0xff]
    %v1071 = vld [vmem:[#allocation2 + $0x348] sm:$0xff]
    %v1072 = vld [vmem:[#allocation2 + $0x350] sm:$0xff]
    %v1073 = vld [vmem:[#allocation2 + $0x358] sm:$0xff]
    %v1074 = vld [vmem:[#allocation2 + $0x360] sm:$0xff]
    %v1075 = vld [vmem:[#allocation2 + $0x368] sm:$0xff]
    %v1076 = vld [vmem:[#allocation2 + $0x370] sm:$0xff]
    %v1077 = vld [vmem:[#allocation2 + $0x378] sm:$0xff]
    %v1078 = vld [vmem:[%s3 + $0x33] ss:$0 sm:$0xff]
    %vm1081 = vcmask 1041408
    %v1082 = vrot.slane %v1039, 6
    %v1083 = vrot.slane %v1041, 6
    %v1084 = vsel %vm1081, %v1082, %v1083
    %1086 = vmatpush.xpose.msra.mxu0 0.0
    %1087 = vmatpush.xpose.msra.mxu0 0.0
    %1088 = vmatpush.xpose.msra.mxu0 0.0
    %1089 = vmatpush.xpose.msra.mxu0 0.0
    %1090 = vmatpush.xpose.msra.mxu0 0.0
    %1091 = vmatpush.xpose.msra.mxu0 0.0
    %1092 = vmatpush.xpose.msra.mxu0 0.0
    %1093 = vmatpush.xpose.msra.mxu0 0.0
    %1094 = vmatpush.xpose.msra.mxu0 0.0
    %1095 = vmatpush.xpose.msra.mxu0 0.0
    %1096 = vmatpush.xpose.msra.mxu0 0.0
    %1097 = vmatpush.xpose.msra.mxu0 0.0
    %1098 = vmatpush.xpose.msra.mxu0 0.0
    %1099 = vmatpush.xpose.msra.mxu0 0.0
    %1100 = vmatpush.xpose.msra.mxu0 0.0
    %1101 = vmatpush.xpose.msra.mxu0 %v965
    %1102 = vmatmul.f32.gmra.mxu0 %v1084
    %v1103 = vpop.f32.mrf.mxu0
    %v1104 = vadd.f32 0.0, %v1103
    %1105 = vdwg.mxu0
    %v1106 = vsel %vm376, %v1104, -inf
    %1107 = vmax.xlane.f32.xlu0 %v1106
    %v1108 = vpop.xlane.xlu0 %1107
    %v1109 = vsub.f32 %v1104, %v1108
    %v1110 = vmul.f32 %v1109, 1.442695
    %v1111 = vpow.pop %v1110
    %v1112 = vsel %vm376, %v1111, 0.0
    %1113 = vadd.xlane.f32.xlu0 %v1112
    %v1114 = vpop.xlane.xlu0 %1113
    %v1115 = vrcp.pop %v1114
    %v1116 = vmul.f32 %v1111, %v1115
    %v1118 = vsel %vm376, %v1116, 0
    %v1121 = vsel %vm380, %v1011, 0
    %1123 = vmatpush.msra.mxu0 0.0
    %1124 = vmatpush.msra.mxu0 0.0
    %1125 = vmatpush.msra.mxu0 0.0
    %1126 = vmatpush.msra.mxu0 0.0
    %1127 = vmatpush.msra.mxu0 0.0
    %1128 = vmatpush.msra.mxu0 0.0
    %1129 = vmatpush.msra.mxu0 0.0
    %1130 = vmatpush.msra.mxu0 0.0
    %1131 = vmatpush.msra.mxu0 0.0
    %1132 = vmatpush.msra.mxu0 0.0
    %1133 = vmatpush.msra.mxu0 0.0
    %1134 = vmatpush.msra.mxu0 0.0
    %1135 = vmatpush.msra.mxu0 0.0
    %1136 = vmatpush.msra.mxu0 0.0
    %1137 = vmatpush.msra.mxu0 0.0
    %1138 = vmatpush.msra.mxu0 %v1121
    %1139 = vmatmul.f32.gmra.mxu0 %v1118
    %v1140 = vpop.f32.mrf.mxu0
    %v1141 = vadd.f32 0.0, %v1140
    %1142 = vdwg.mxu0
    %v1145 = vrot.slane %v1040, 6
    %v1146 = vrot.slane %v1042, 6
    %v1147 = vsel %vm1081, %v1145, %v1146
    %1149 = vmatpush.xpose.msra.mxu0 0.0
    %1150 = vmatpush.xpose.msra.mxu0 0.0
    %1151 = vmatpush.xpose.msra.mxu0 0.0
    %1152 = vmatpush.xpose.msra.mxu0 0.0
    %1153 = vmatpush.xpose.msra.mxu0 0.0
    %1154 = vmatpush.xpose.msra.mxu0 0.0
    %1155 = vmatpush.xpose.msra.mxu0 0.0
    %1156 = vmatpush.xpose.msra.mxu0 0.0
    %1157 = vmatpush.xpose.msra.mxu0 0.0
    %1158 = vmatpush.xpose.msra.mxu0 0.0
    %1159 = vmatpush.xpose.msra.mxu0 0.0
    %1160 = vmatpush.xpose.msra.mxu0 0.0
    %1161 = vmatpush.xpose.msra.mxu0 0.0
    %1162 = vmatpush.xpose.msra.mxu0 0.0
    %1163 = vmatpush.xpose.msra.mxu0 0.0
    %1164 = vmatpush.xpose.msra.mxu0 %v988
    %1165 = vmatmul.f32.gmra.mxu0 %v1147
    %v1166 = vpop.f32.mrf.mxu0
    %v1167 = vadd.f32 0.0, %v1166
    %1168 = vdwg.mxu0
    %v1169 = vsel %vm376, %v1167, -inf
    %1170 = vmax.xlane.f32.xlu0 %v1169
    %v1171 = vpop.xlane.xlu0 %1170
    %v1172 = vsub.f32 %v1167, %v1171
    %v1173 = vmul.f32 %v1172, 1.442695
    %v1174 = vpow.pop %v1173
    %v1175 = vsel %vm376, %v1174, 0.0
    %1176 = vadd.xlane.f32.xlu0 %v1175
    %v1177 = vpop.xlane.xlu0 %1176
    %v1178 = vrcp.pop %v1177
    %v1179 = vmul.f32 %v1174, %v1178
    %v1181 = vsel %vm376, %v1179, 0
    %v1184 = vsel %vm380, %v1034, 0
    %1186 = vmatpush.msra.mxu0 0.0
    %1187 = vmatpush.msra.mxu0 0.0
    %1188 = vmatpush.msra.mxu0 0.0
    %1189 = vmatpush.msra.mxu0 0.0
    %1190 = vmatpush.msra.mxu0 0.0
    %1191 = vmatpush.msra.mxu0 0.0
    %1192 = vmatpush.msra.mxu0 0.0
    %1193 = vmatpush.msra.mxu0 0.0
    %1194 = vmatpush.msra.mxu0 0.0
    %1195 = vmatpush.msra.mxu0 0.0
    %1196 = vmatpush.msra.mxu0 0.0
    %1197 = vmatpush.msra.mxu0 0.0
    %1198 = vmatpush.msra.mxu0 0.0
    %1199 = vmatpush.msra.mxu0 0.0
    %1200 = vmatpush.msra.mxu0 0.0
    %1201 = vmatpush.msra.mxu0 %v1184
    %1202 = vmatmul.f32.gmra.mxu0 %v1181
    %v1203 = vpop.f32.mrf.mxu0
    %v1204 = vadd.f32 0.0, %v1203
    %1205 = vdwg.mxu0
    %v1208 = vrot.slane %v965, 5
    %v1209 = vrot.slane %v968, 5
    %v1210 = vsel %vm463, %v1208, %v1209
    %1212 = vmatpush.xpose.msra.mxu0 0.0
    %1213 = vmatpush.xpose.msra.mxu0 0.0
    %1214 = vmatpush.xpose.msra.mxu0 0.0
    %1215 = vmatpush.xpose.msra.mxu0 0.0
    %1216 = vmatpush.xpose.msra.mxu0 0.0
    %1217 = vmatpush.xpose.msra.mxu0 0.0
    %1218 = vmatpush.xpose.msra.mxu0 0.0
    %1219 = vmatpush.xpose.msra.mxu0 0.0
    %1220 = vmatpush.xpose.msra.mxu0 0.0
    %1221 = vmatpush.xpose.msra.mxu0 0.0
    %1222 = vmatpush.xpose.msra.mxu0 0.0
    %1223 = vmatpush.xpose.msra.mxu0 0.0
    %1224 = vmatpush.xpose.msra.mxu0 0.0
    %1225 = vmatpush.xpose.msra.mxu0 0.0
    %1226 = vmatpush.xpose.msra.mxu0 0.0
    %1227 = vmatpush.xpose.msra.mxu0 %v1210
    %1228 = vmatmul.f32.gmra.mxu0 %v1084
    %v1229 = vpop.f32.mrf.mxu0
    %v1230 = vadd.f32 0.0, %v1229
    %1231 = vdwg.mxu0
    %v1232 = vsel %vm376, %v1230, -inf
    %1233 = vmax.xlane.f32.xlu0 %v1232
    %v1234 = vpop.xlane.xlu0 %1233
    %v1235 = vsub.f32 %v1230, %v1234
    %v1236 = vmul.f32 %v1235, 1.442695
    %v1237 = vpow.pop %v1236
    %v1238 = vsel %vm376, %v1237, 0.0
    %1239 = vadd.xlane.f32.xlu0 %v1238
    %v1240 = vpop.xlane.xlu0 %1239
    %v1241 = vrcp.pop %v1240
    %v1242 = vmul.f32 %v1237, %v1241
    %v1244 = vrot.slane %v1011, 5
    %v1245 = vrot.slane %v1014, 5
    %v1246 = vsel %vm463, %v1244, %v1245
    %v1248 = vsel %vm376, %v1242, 0
    %v1250 = vsel %vm380, %v1246, 0
    %1252 = vmatpush.msra.mxu0 0.0
    %1253 = vmatpush.msra.mxu0 0.0
    %1254 = vmatpush.msra.mxu0 0.0
    %1255 = vmatpush.msra.mxu0 0.0
    %1256 = vmatpush.msra.mxu0 0.0
    %1257 = vmatpush.msra.mxu0 0.0
    %1258 = vmatpush.msra.mxu0 0.0
    %1259 = vmatpush.msra.mxu0 0.0
    %1260 = vmatpush.msra.mxu0 0.0
    %1261 = vmatpush.msra.mxu0 0.0
    %1262 = vmatpush.msra.mxu0 0.0
    %1263 = vmatpush.msra.mxu0 0.0
    %1264 = vmatpush.msra.mxu0 0.0
    %1265 = vmatpush.msra.mxu0 0.0
    %1266 = vmatpush.msra.mxu0 0.0
    %1267 = vmatpush.msra.mxu0 %v1250
    %1268 = vmatmul.f32.gmra.mxu0 %v1248
    %v1269 = vpop.f32.mrf.mxu0
    %v1270 = vadd.f32 0.0, %v1269
    %1271 = vdwg.mxu0
    %v1274 = vrot.slane %v988, 5
    %v1275 = vrot.slane %v991, 5
    %v1276 = vsel %vm463, %v1274, %v1275
    %1278 = vmatpush.xpose.msra.mxu0 0.0
    %1279 = vmatpush.xpose.msra.mxu0 0.0
    %1280 = vmatpush.xpose.msra.mxu0 0.0
    %1281 = vmatpush.xpose.msra.mxu0 0.0
    %1282 = vmatpush.xpose.msra.mxu0 0.0
    %1283 = vmatpush.xpose.msra.mxu0 0.0
    %1284 = vmatpush.xpose.msra.mxu0 0.0
    %1285 = vmatpush.xpose.msra.mxu0 0.0
    %1286 = vmatpush.xpose.msra.mxu0 0.0
    %1287 = vmatpush.xpose.msra.mxu0 0.0
    %1288 = vmatpush.xpose.msra.mxu0 0.0
    %1289 = vmatpush.xpose.msra.mxu0 0.0
    %1290 = vmatpush.xpose.msra.mxu0 0.0
    %1291 = vmatpush.xpose.msra.mxu0 0.0
    %1292 = vmatpush.xpose.msra.mxu0 0.0
    %1293 = vmatpush.xpose.msra.mxu0 %v1276
    %1294 = vmatmul.f32.gmra.mxu0 %v1147
    %v1295 = vpop.f32.mrf.mxu0
    %v1296 = vadd.f32 0.0, %v1295
    %1297 = vdwg.mxu0
    %v1298 = vsel %vm376, %v1296, -inf
    %1299 = vmax.xlane.f32.xlu0 %v1298
    %v1300 = vpop.xlane.xlu0 %1299
    %v1301 = vsub.f32 %v1296, %v1300
    %v1302 = vmul.f32 %v1301, 1.442695
    %v1303 = vpow.pop %v1302
    %v1304 = vsel %vm376, %v1303, 0.0
    %1305 = vadd.xlane.f32.xlu0 %v1304
    %v1306 = vpop.xlane.xlu0 %1305
    %v1307 = vrcp.pop %v1306
    %v1308 = vmul.f32 %v1303, %v1307
    %v1310 = vrot.slane %v1034, 5
    %v1311 = vrot.slane %v1037, 5
    %v1312 = vsel %vm463, %v1310, %v1311
    %v1314 = vsel %vm376, %v1308, 0
    %v1316 = vsel %vm380, %v1312, 0
    %1318 = vmatpush.msra.mxu0 0.0
    %1319 = vmatpush.msra.mxu0 0.0
    %1320 = vmatpush.msra.mxu0 0.0
    %1321 = vmatpush.msra.mxu0 0.0
    %1322 = vmatpush.msra.mxu0 0.0
    %1323 = vmatpush.msra.mxu0 0.0
    %1324 = vmatpush.msra.mxu0 0.0
    %1325 = vmatpush.msra.mxu0 0.0
    %1326 = vmatpush.msra.mxu0 0.0
    %1327 = vmatpush.msra.mxu0 0.0
    %1328 = vmatpush.msra.mxu0 0.0
    %1329 = vmatpush.msra.mxu0 0.0
    %1330 = vmatpush.msra.mxu0 0.0
    %1331 = vmatpush.msra.mxu0 0.0
    %1332 = vmatpush.msra.mxu0 0.0
    %1333 = vmatpush.msra.mxu0 %v1316
    %1334 = vmatmul.f32.gmra.mxu0 %v1314
    %v1335 = vpop.f32.mrf.mxu0
    %v1336 = vadd.f32 0.0, %v1335
    %1337 = vdwg.mxu0
    %1338 = vmatpush.msra.mxu0 %v1061
    %1339 = vmatpush.msra.mxu0 %v1060
    %1340 = vmatpush.msra.mxu0 %v1059
    %1341 = vmatpush.msra.mxu0 %v1058
    %1342 = vmatpush.msra.mxu0 %v1057
    %1343 = vmatpush.msra.mxu0 %v1056
    %1344 = vmatpush.msra.mxu0 %v1055
    %1345 = vmatpush.msra.mxu0 %v1054
    %1346 = vmatpush.msra.mxu0 %v1053
    %1347 = vmatpush.msra.mxu0 %v1052
    %1348 = vmatpush.msra.mxu0 %v1051
    %1349 = vmatpush.msra.mxu0 %v1050
    %1350 = vmatpush.msra.mxu0 %v1049
    %1351 = vmatpush.msra.mxu0 %v1048
    %1352 = vmatpush.msra.mxu0 %v1047
    %1353 = vmatpush.msra.mxu0 %v1046
    %1354 = vmatmul.f32.gmra.mxu0 %v1141
    %v1355 = vpop.f32.mrf.mxu0
    %v1356 = vadd.f32 %v1078, %v1355
    %1357 = vmatmul.f32.gmra.mxu0 %v1270
    %v1358 = vpop.f32.mrf.mxu0
    %v1359 = vadd.f32 %v1078, %v1358
    %1360 = vdwg.mxu0
    %1361 = vmatpush.msra.mxu0 %v1077
    %1362 = vmatpush.msra.mxu0 %v1076
    %1363 = vmatpush.msra.mxu0 %v1075
    %1364 = vmatpush.msra.mxu0 %v1074
    %1365 = vmatpush.msra.mxu0 %v1073
    %1366 = vmatpush.msra.mxu0 %v1072
    %1367 = vmatpush.msra.mxu0 %v1071
    %1368 = vmatpush.msra.mxu0 %v1070
    %1369 = vmatpush.msra.mxu0 %v1069
    %1370 = vmatpush.msra.mxu0 %v1068
    %1371 = vmatpush.msra.mxu0 %v1067
    %1372 = vmatpush.msra.mxu0 %v1066
    %1373 = vmatpush.msra.mxu0 %v1065
    %1374 = vmatpush.msra.mxu0 %v1064
    %1375 = vmatpush.msra.mxu0 %v1063
    %1376 = vmatpush.msra.mxu0 %v1062
    %1377 = vmatmul.f32.gmra.mxu0 %v1204
    %v1378 = vpop.f32.mrf.mxu0
    %v1379 = vadd.f32 %v1356, %v1378
    %1380 = vmatmul.f32.gmra.mxu0 %v1336
    %v1381 = vpop.f32.mrf.mxu0
    %v1382 = vadd.f32 %v1359, %v1381
    %1383 = vdwg.mxu0
    %vm1386 = vcmask 1045504
    %v1387 = vrot.slane %v1379, 2
    %v1388 = vrot.slane %v1382, 2
    %v1389 = vsel %vm1386, %v1387, %v1388
    %v1393 = vadd.f32 %v1043, %v1387
    %v1394 = vadd.f32 %v1044, %v1389
    %v1395 = vadd.f32 %v1045, %v1388
    %v1396 = vld [vmem:[%s3 + $0x34] ss:$0 sm:$0xff]
    %v1397 = vld [vmem:[%s3 + $0x35] ss:$0 sm:$0xff]
    %vm1398 = vcmask 261126
    %v1399 = vsel %vm1398, %v1393, 0.0
    %1400 = vadd.xlane.f32.xlu0 %v1399
    %v1401 = vpop.xlane.xlu0 %1400
    %v1402 = vsel %vm166, %v1394, 0.0
    %1403 = vadd.xlane.f32.xlu0 %v1402
    %v1404 = vpop.xlane.xlu0 %1403
    %vm1405 = vcmask 259072
    %v1406 = vsel %vm1405, %v1395, 0.0
    %1407 = vadd.xlane.f32.xlu0 %v1406
    %v1408 = vpop.xlane.xlu0 %1407
    %v1409 = vmul.f32 %v1401, %v677
    %v1410 = vmul.f32 %v1404, %v677
    %v1411 = vmul.f32 %v1408, %v677
    %v1412 = vsub.f32 %v1393, %v1409
    %v1413 = vsub.f32 %v1394, %v1410
    %v1414 = vsub.f32 %v1395, %v1411
    %v1415 = vmul.f32 %v1412, %v1412
    %v1416 = vmul.f32 %v1413, %v1413
    %v1417 = vmul.f32 %v1414, %v1414
    %v1418 = vsel %vm1398, %v1415, 0.0
    %1419 = vadd.xlane.f32.xlu0 %v1418
    %v1420 = vpop.xlane.xlu0 %1419
    %v1421 = vsel %vm166, %v1416, 0.0
    %1422 = vadd.xlane.f32.xlu0 %v1421
    %v1423 = vpop.xlane.xlu0 %1422
    %v1424 = vsel %vm1405, %v1417, 0.0
    %1425 = vadd.xlane.f32.xlu0 %v1424
    %v1426 = vpop.xlane.xlu0 %1425
    %v1427 = vmul.f32 %v1420, %v677
    %v1428 = vmul.f32 %v1423, %v677
    %v1429 = vmul.f32 %v1426, %v677
    %v1430 = vadd.f32 %v1427, 1e-12
    %v1431 = vadd.f32 %v1428, 1e-12
    %v1432 = vadd.f32 %v1429, 1e-12
    %v1433 = vrsqrt.pop %v1430
    %v1434 = vmul.f32 %v1433, %v1430
    %v1435 = vmul.f32 %v1434, %v1433
    %v1436 = vmul.f32 0.5, %v1435
    %v1437 = vsub.f32 1.5, %v1436
    %v1438 = vmul.f32 %v1433, %v1437
    %vm1439 = vweird.f32 %v1430
    %vm1440 = vweird.f32 %v1433
    %vm1441 = vmor %vm1439, %vm1440
    %v1442 = vsel %vm1441, %v1433, %v1438
    %v1443 = vrsqrt.pop %v1431
    %v1444 = vmul.f32 %v1443, %v1431
    %v1445 = vmul.f32 %v1444, %v1443
    %v1446 = vmul.f32 0.5, %v1445
    %v1447 = vsub.f32 1.5, %v1446
    %v1448 = vmul.f32 %v1443, %v1447
    %vm1449 = vweird.f32 %v1431
    %vm1450 = vweird.f32 %v1443
    %vm1451 = vmor %vm1449, %vm1450
    %v1452 = vsel %vm1451, %v1443, %v1448
    %v1453 = vrsqrt.pop %v1432
    %v1454 = vmul.f32 %v1453, %v1432
    %v1455 = vmul.f32 %v1454, %v1453
    %v1456 = vmul.f32 0.5, %v1455
    %v1457 = vsub.f32 1.5, %v1456
    %v1458 = vmul.f32 %v1453, %v1457
    %vm1459 = vweird.f32 %v1432
    %vm1460 = vweird.f32 %v1453
    %vm1461 = vmor %vm1459, %vm1460
    %v1462 = vsel %vm1461, %v1453, %v1458
    %v1463 = vmul.f32 %v1412, %v1442
    %v1464 = vmul.f32 %v1413, %v1452
    %v1465 = vmul.f32 %v1414, %v1462
    %v1466 = vmul.f32 %v1463, %v1396
    %v1467 = vmul.f32 %v1464, %v1396
    %v1468 = vmul.f32 %v1465, %v1396
    %v1469 = vadd.f32 %v1466, %v1397
    %v1470 = vadd.f32 %v1467, %v1397
    %v1471 = vadd.f32 %v1468, %v1397
    %v1472 = vld [vmem:[%s1 + $0x58] sm:$0xff]
    %v1473 = vld [vmem:[%s1 + $0xc8] sm:$0xff]
    %v1474 = vld [vmem:[%s1 + $0x138] sm:$0xff]
    %v1475 = vld [vmem:[%s1 + $0x1a8] sm:$0xff]
    %v1476 = vld [vmem:[%s3 + $0x36] ss:$0 sm:$0xff]
    %v1480 = vrot.slane %v1469, 6
    %v1481 = vrot.slane %v1470, 6
    %v1482 = vsel %vm1081, %v1480, %v1481
    %v1483 = vrot.slane %v1471, 6
    %v1484 = vsel %vm1081, %v1481, %v1483
    %v1485 = vsel %vm166, %v1482, 0
    %v1487 = vsel %vm166, %v1484, 0
    %1489 = vmatpush.msra.mxu0 0.0
    %1490 = vmatpush.msra.mxu0 0.0
    %1491 = vmatpush.msra.mxu0 0.0
    %1492 = vmatpush.msra.mxu0 0.0
    %1493 = vmatpush.msra.mxu0 0.0
    %1494 = vmatpush.msra.mxu0 0.0
    %1495 = vmatpush.msra.mxu0 0.0
    %1496 = vmatpush.msra.mxu0 0.0
    %1497 = vmatpush.msra.mxu0 0.0
    %1498 = vmatpush.msra.mxu0 0.0
    %1499 = vmatpush.msra.mxu0 0.0
    %1500 = vmatpush.msra.mxu0 0.0
    %1501 = vmatpush.msra.mxu0 %v1475
    %1502 = vmatpush.msra.mxu0 %v1474
    %1503 = vmatpush.msra.mxu0 %v1473
    %1504 = vmatpush.msra.mxu0 %v1472
    %1505 = vmatmul.f32.gmra.mxu0 %v1485
    %v1506 = vpop.f32.mrf.mxu0
    %v1507 = vadd.f32 %v1476, %v1506
    %1508 = vmatmul.f32.gmra.mxu0 %v1487
    %v1509 = vpop.f32.mrf.mxu0
    %v1510 = vadd.f32 %v1476, %v1509
    %1511 = vdwg.mxu0
    %v1512 = vmul.f32 %v1507, %v1507
    %v1513 = vmul.f32 %v1510, %v1510
    %v1514 = vmul.f32 %v1507, %v1512
    %v1515 = vmul.f32 %v1510, %v1513
    %v1516 = vmul.f32 %v1514, 0.044715
    %v1517 = vmul.f32 %v1515, 0.044715
    %v1518 = vadd.f32 %v1507, %v1516
    %v1519 = vadd.f32 %v1510, %v1517
    %v1520 = vmul.f32 %v1518, 0.7978846
    %v1521 = vmul.f32 %v1519, 0.7978846
    %v1522 = vtanh.pop %v1520
    %v1523 = vtanh.pop %v1521
    %v1524 = vadd.f32 %v1522, 1.0
    %v1525 = vadd.f32 %v1523, 1.0
    %v1526 = vmul.f32 %v1524, 0.5
    %v1527 = vmul.f32 %v1525, 0.5
    %v1528 = vmul.f32 %v1507, %v1526
    %v1529 = vmul.f32 %v1510, %v1527
    %v1530 = vld [vmem:[#allocation2 + $0x380] sm:$0xff]
    %v1531 = vld [vmem:[#allocation2 + $0x388] sm:$0xff]
    %v1532 = vld [vmem:[#allocation2 + $0x390] sm:$0xff]
    %v1533 = vld [vmem:[#allocation2 + $0x398] sm:$0xff]
    %v1534 = vld [vmem:[#allocation2 + $0x3a0] sm:$0xff]
    %v1535 = vld [vmem:[#allocation2 + $0x3a8] sm:$0xff]
    %v1536 = vld [vmem:[#allocation2 + $0x3b0] sm:$0xff]
    %v1537 = vld [vmem:[#allocation2 + $0x3b8] sm:$0xff]
    %v1538 = vld [vmem:[#allocation2 + $0x3c0] sm:$0xff]
    %v1539 = vld [vmem:[#allocation2 + $0x3c8] sm:$0xff]
    %v1540 = vld [vmem:[#allocation2 + $0x3d0] sm:$0xff]
    %v1541 = vld [vmem:[#allocation2 + $0x3d8] sm:$0xff]
    %v1542 = vld [vmem:[#allocation2 + $0x3e0] sm:$0xff]
    %v1543 = vld [vmem:[#allocation2 + $0x3e8] sm:$0xff]
    %v1544 = vld [vmem:[#allocation2 + $0x3f0] sm:$0xff]
    %v1545 = vld [vmem:[#allocation2 + $0x3f8] sm:$0xff]
    %v1546 = vld [vmem:[%s3 + $0x37] ss:$0 sm:$0xff]
    %1547 = vmatpush.msra.mxu0 %v1545
    %1548 = vmatpush.msra.mxu0 %v1544
    %1549 = vmatpush.msra.mxu0 %v1543
    %1550 = vmatpush.msra.mxu0 %v1542
    %1551 = vmatpush.msra.mxu0 %v1541
    %1552 = vmatpush.msra.mxu0 %v1540
    %1553 = vmatpush.msra.mxu0 %v1539
    %1554 = vmatpush.msra.mxu0 %v1538
    %1555 = vmatpush.msra.mxu0 %v1537
    %1556 = vmatpush.msra.mxu0 %v1536
    %1557 = vmatpush.msra.mxu0 %v1535
    %1558 = vmatpush.msra.mxu0 %v1534
    %1559 = vmatpush.msra.mxu0 %v1533
    %1560 = vmatpush.msra.mxu0 %v1532
    %1561 = vmatpush.msra.mxu0 %v1531
    %1562 = vmatpush.msra.mxu0 %v1530
    %1563 = vmatmul.f32.gmra.mxu0 %v1528
    %v1564 = vpop.f32.mrf.mxu0
    %v1565 = vadd.f32 %v1546, %v1564
    %1566 = vmatmul.f32.gmra.mxu0 %v1529
    %v1567 = vpop.f32.mrf.mxu0
    %v1568 = vadd.f32 %v1546, %v1567
    %1569 = vdwg.mxu0
    %v1572 = vrot.slane %v1565, 2
    %v1573 = vrot.slane %v1568, 2
    %v1574 = vsel %vm1386, %v1572, %v1573
    %v1577 = vadd.f32 %v1469, %v1572
    %v1578 = vadd.f32 %v1470, %v1574
    %v1579 = vld [vmem:[%s3 + $0x60] ss:$0 sm:$0xff]
    %v1580 = vld [vmem:[%s3 + $0x61] ss:$0 sm:$0xff]
    %v1581 = vsel %vm1398, %v1577, 0.0
    %1582 = vadd.xlane.f32.xlu0 %v1581
    %v1583 = vpop.xlane.xlu0 %1582
    %v1584 = vsel %vm166, %v1578, 0.0
    %1585 = vadd.xlane.f32.xlu0 %v1584
    %v1586 = vpop.xlane.xlu0 %1585
    %v1587 = vmul.f32 %v1583, %v677
    %v1588 = vmul.f32 %v1586, %v677
    %v1589 = vsub.f32 %v1577, %v1587
    %v1590 = vsub.f32 %v1578, %v1588
    %v1591 = vmul.f32 %v1589, %v1589
    %v1592 = vmul.f32 %v1590, %v1590
    %v1593 = vsel %vm1398, %v1591, 0.0
    %1594 = vadd.xlane.f32.xlu0 %v1593
    %v1595 = vpop.xlane.xlu0 %1594
    %v1596 = vsel %vm166, %v1592, 0.0
    %1597 = vadd.xlane.f32.xlu0 %v1596
    %v1598 = vpop.xlane.xlu0 %1597
    %v1599 = vmul.f32 %v1595, %v677
    %v1600 = vmul.f32 %v1598, %v677
    %v1601 = vadd.f32 %v1599, 1e-12
    %v1602 = vadd.f32 %v1600, 1e-12
    %v1603 = vrsqrt.pop %v1601
    %v1604 = vmul.f32 %v1603, %v1601
    %v1605 = vmul.f32 %v1604, %v1603
    %v1606 = vmul.f32 0.5, %v1605
    %v1607 = vsub.f32 1.5, %v1606
    %v1608 = vmul.f32 %v1603, %v1607
    %vm1609 = vweird.f32 %v1601
    %vm1610 = vweird.f32 %v1603
    %vm1611 = vmor %vm1609, %vm1610
    %v1612 = vsel %vm1611, %v1603, %v1608
    %v1613 = vrsqrt.pop %v1602
    %v1614 = vmul.f32 %v1613, %v1602
    %v1615 = vmul.f32 %v1614, %v1613
    %v1616 = vmul.f32 0.5, %v1615
    %v1617 = vsub.f32 1.5, %v1616
    %v1618 = vmul.f32 %v1613, %v1617
    %vm1619 = vweird.f32 %v1602
    %vm1620 = vweird.f32 %v1613
    %vm1621 = vmor %vm1619, %vm1620
    %v1622 = vsel %vm1621, %v1613, %v1618
    %v1623 = vmul.f32 %v1589, %v1612
    %v1624 = vmul.f32 %v1590, %v1622
    %v1625 = vmul.f32 %v1623, %v1579
    %v1626 = vmul.f32 %v1624, %v1579
    %v1627 = vadd.f32 %v1625, %v1580
    %v1628 = vadd.f32 %v1626, %v1580
    %v1630 = vrot.slane %v1627, 6
    %v1633 = vrot.slane %v1628, 5
    %vm1635 = vcmask 1040384
    %v1636 = vsel %vm1635, %v1630, %v1633
    %v1637 = vld [vmem:[%s1 + $0x60] sm:$0xff]
    %v1638 = vld [vmem:[%s1 + $0x68] sm:$0xff]
    %v1639 = vld [vmem:[%s1 + $0xd0] sm:$0xff]
    %v1640 = vld [vmem:[%s1 + $0xd8] sm:$0xff]
    %v1641 = vld [vmem:[%s1 + $0x140] sm:$0xff]
    %v1642 = vld [vmem:[%s1 + $0x148] sm:$0xff]
    %v1643 = vld [vmem:[%s1 + $0x1b0] sm:$0xff]
    %v1644 = vld [vmem:[%s1 + $0x1b8] sm:$0xff]
    %s1645 = scalar_lea.vmem %s3, 98
    %v1646 = vld [vmem:[%s1645] ss:$8 sm:$0x3]
    %v1648 = vperm.slane %v1646, 0
    %v1649 = vperm.slane %v1646, 1
    %v1653 = vsel %vm166, %v1636, 0
    %1655 = vmatpush.msra.mxu0 0.0
    %1656 = vmatpush.msra.mxu0 0.0
    %1657 = vmatpush.msra.mxu0 0.0
    %1658 = vmatpush.msra.mxu0 0.0
    %1659 = vmatpush.msra.mxu0 0.0
    %1660 = vmatpush.msra.mxu0 0.0
    %1661 = vmatpush.msra.mxu0 0.0
    %1662 = vmatpush.msra.mxu0 0.0
    %1663 = vmatpush.msra.mxu0 0.0
    %1664 = vmatpush.msra.mxu0 0.0
    %1665 = vmatpush.msra.mxu0 0.0
    %1666 = vmatpush.msra.mxu0 0.0
    %1667 = vmatpush.msra.mxu0 %v1643
    %1668 = vmatpush.msra.mxu0 %v1641
    %1669 = vmatpush.msra.mxu0 %v1639
    %1670 = vmatpush.msra.mxu0 %v1637
    %1671 = vmatmul.f32.gmra.mxu0 %v1653
    %v1672 = vpop.f32.mrf.mxu0
    %v1673 = vadd.f32 %v1648, %v1672
    %1674 = vdwg.mxu0
    %1675 = vmatpush.msra.mxu0 0.0
    %1676 = vmatpush.msra.mxu0 0.0
    %1677 = vmatpush.msra.mxu0 0.0
    %1678 = vmatpush.msra.mxu0 0.0
    %1679 = vmatpush.msra.mxu0 0.0
    %1680 = vmatpush.msra.mxu0 0.0
    %1681 = vmatpush.msra.mxu0 0.0
    %1682 = vmatpush.msra.mxu0 0.0
    %1683 = vmatpush.msra.mxu0 0.0
    %1684 = vmatpush.msra.mxu0 0.0
    %1685 = vmatpush.msra.mxu0 0.0
    %1686 = vmatpush.msra.mxu0 0.0
    %1687 = vmatpush.msra.mxu0 %v1644
    %1688 = vmatpush.msra.mxu0 %v1642
    %1689 = vmatpush.msra.mxu0 %v1640
    %1690 = vmatpush.msra.mxu0 %v1638
    %1691 = vmatmul.f32.gmra.mxu0 %v1653
    %v1692 = vpop.f32.mrf.mxu0
    %v1693 = vadd.f32 %v1649, %v1692
    %1694 = vdwg.mxu0
    %v1695 = vmax.f32 %v1673, 0.0
    %v1696 = vmax.f32 %v1693, 0.0
    %v1697 = vld [vmem:[#allocation2 + $0x400] sm:$0xff]
    %v1698 = vld [vmem:[#allocation2 + $0x408] sm:$0xff]
    %v1699 = vld [vmem:[#allocation2 + $0x410] sm:$0xff]
    %v1700 = vld [vmem:[#allocation2 + $0x418] sm:$0xff]
    %v1701 = vld [vmem:[#allocation2 + $0x420] sm:$0xff]
    %v1702 = vld [vmem:[#allocation2 + $0x428] sm:$0xff]
    %v1703 = vld [vmem:[#allocation2 + $0x430] sm:$0xff]
    %v1704 = vld [vmem:[#allocation2 + $0x438] sm:$0xff]
    %v1705 = vld [vmem:[#allocation2 + $0x440] sm:$0xff]
    %v1706 = vld [vmem:[#allocation2 + $0x448] sm:$0xff]
    %v1707 = vld [vmem:[#allocation2 + $0x450] sm:$0xff]
    %v1708 = vld [vmem:[#allocation2 + $0x458] sm:$0xff]
    %v1709 = vld [vmem:[#allocation2 + $0x460] sm:$0xff]
    %v1710 = vld [vmem:[#allocation2 + $0x468] sm:$0xff]
    %v1711 = vld [vmem:[#allocation2 + $0x470] sm:$0xff]
    %v1712 = vld [vmem:[#allocation2 + $0x478] sm:$0xff]
    %v1713 = vld [vmem:[#allocation2 + $0x480] sm:$0xff]
    %v1714 = vld [vmem:[#allocation2 + $0x488] sm:$0xff]
    %v1715 = vld [vmem:[#allocation2 + $0x490] sm:$0xff]
    %v1716 = vld [vmem:[#allocation2 + $0x498] sm:$0xff]
    %v1717 = vld [vmem:[#allocation2 + $0x4a0] sm:$0xff]
    %v1718 = vld [vmem:[#allocation2 + $0x4a8] sm:$0xff]
    %v1719 = vld [vmem:[#allocation2 + $0x4b0] sm:$0xff]
    %v1720 = vld [vmem:[#allocation2 + $0x4b8] sm:$0xff]
    %v1721 = vld [vmem:[#allocation2 + $0x4c0] sm:$0xff]
    %v1722 = vld [vmem:[#allocation2 + $0x4c8] sm:$0xff]
    %v1723 = vld [vmem:[#allocation2 + $0x4d0] sm:$0xff]
    %v1724 = vld [vmem:[#allocation2 + $0x4d8] sm:$0xff]
    %v1725 = vld [vmem:[#allocation2 + $0x4e0] sm:$0xff]
    %v1726 = vld [vmem:[#allocation2 + $0x4e8] sm:$0xff]
    %v1727 = vld [vmem:[#allocation2 + $0x4f0] sm:$0xff]
    %v1728 = vld [vmem:[#allocation2 + $0x4f8] sm:$0xff]
    %v1729 = vld [vmem:[%s3 + $0x63] ss:$0 sm:$0xff]
    %1730 = vmatpush.msra.mxu0 %v1712
    %1731 = vmatpush.msra.mxu0 %v1711
    %1732 = vmatpush.msra.mxu0 %v1710
    %1733 = vmatpush.msra.mxu0 %v1709
    %1734 = vmatpush.msra.mxu0 %v1708
    %1735 = vmatpush.msra.mxu0 %v1707
    %1736 = vmatpush.msra.mxu0 %v1706
    %1737 = vmatpush.msra.mxu0 %v1705
    %1738 = vmatpush.msra.mxu0 %v1704
    %1739 = vmatpush.msra.mxu0 %v1703
    %1740 = vmatpush.msra.mxu0 %v1702
    %1741 = vmatpush.msra.mxu0 %v1701
    %1742 = vmatpush.msra.mxu0 %v1700
    %1743 = vmatpush.msra.mxu0 %v1699
    %1744 = vmatpush.msra.mxu0 %v1698
    %1745 = vmatpush.msra.mxu0 %v1697
    %1746 = vmatmul.f32.gmra.mxu0 %v1695
    %v1747 = vpop.f32.mrf.mxu0
    %v1748 = vadd.f32 %v1729, %v1747
    %1749 = vdwg.mxu0
    %1750 = vmatpush.msra.mxu0 %v1728
    %1751 = vmatpush.msra.mxu0 %v1727
    %1752 = vmatpush.msra.mxu0 %v1726
    %1753 = vmatpush.msra.mxu0 %v1725
    %1754 = vmatpush.msra.mxu0 %v1724
    %1755 = vmatpush.msra.mxu0 %v1723
    %1756 = vmatpush.msra.mxu0 %v1722
    %1757 = vmatpush.msra.mxu0 %v1721
    %1758 = vmatpush.msra.mxu0 %v1720
    %1759 = vmatpush.msra.mxu0 %v1719
    %1760 = vmatpush.msra.mxu0 %v1718
    %1761 = vmatpush.msra.mxu0 %v1717
    %1762 = vmatpush.msra.mxu0 %v1716
    %1763 = vmatpush.msra.mxu0 %v1715
    %1764 = vmatpush.msra.mxu0 %v1714
    %1765 = vmatpush.msra.mxu0 %v1713
    %1766 = vmatmul.f32.gmra.mxu0 %v1696
    %v1767 = vpop.f32.mrf.mxu0
    %v1768 = vadd.f32 %v1748, %v1767
    %1769 = vdwg.mxu0
    %1770 = vst [vmem:[#allocation5] sm:$0x3] %v1768
    // Predicated region
    $region22: #{blip_with_metrics_head_forward.1} parent=1 // pred_check
      _
    $region23: #{blip_with_metrics_head_forward.1} parent=1 // pred_check_branch
      %1772 = sbr.rel (0) target = $region25
    $region24: #{blip_with_metrics_head_forward.1} parent=1 // pred_region
      %1774 = vsyncadd [#allocation4], 0
      %s1776 = sshll.u32 [#allocation5], 4
      %s1777 = int_to_ptr.vmem [resolvable:$true] %s1776
      %s1778 = sshll.u32 %s4, 4
      %s1779 = int_to_ptr.hbm [resolvable:$true] %s1778
      %1781 = dma.vmem_to_hbm [thread:$0]  %s1777, 32, %s1779, [#allocation4]
    $region25: #{blip_with_metrics_head_forward.1} parent=1 // pred_fallthru
      _
    // Predicated region
    $region26: #{blip_with_metrics_head_forward.1} parent=1 // pred_check
      _
    $region27: #{blip_with_metrics_head_forward.1} parent=1 // pred_check_branch
      %1783 = sbr.rel (0) target = $region29
    $region28: #{blip_with_metrics_head_forward.1} parent=1 // pred_region
      %1785 = dma.done [#allocation4], 32
    $region29: #{blip_with_metrics_head_forward.1} parent=1 // pred_fallthru
      _
    %1786 = vsyncpa [#allocation3], 1
    %1787 = vsyncpa [#allocation4], 1

</llo_original>
